<compile_context>
chip_gen: v7x
topology: tpu7x:2x2x1
jax: 0.10.0
libtpu: 0.0.40
codegen_flags: <defaults>
</compile_context>

<pallas_src>
import functools
import math

import jax
import jax.numpy as jnp
from jax.experimental import pallas as pl
from jax.experimental.pallas import tpu as pltpu

LANE = 128

# Rows in the packed [16, 128] bias buffer.
_B_TRUNK0, _B_TRUNK1, _B_TRUNK2 = 0, 1, 2
_B_LSTM_I, _B_LSTM_F, _B_LSTM_G, _B_LSTM_O = 3, 4, 5, 6
_B_ACT0, _B_ACT1, _B_ACT2, _B_ACT3 = 7, 8, 9, 10
_B_PART0, _B_PART1, _B_PART2, _B_PART3 = 11, 12, 13, 14
_B_WP0A = 15          # row holding the weight column that multiplies the action
_N_BIAS_ROWS = 16

# Slots in the packed [11, 128, 128] weight stack.
_W_TRUNK0, _W_TRUNK1, _W_TRUNK2 = 0, 1, 2
_W_ACT0, _W_ACT1, _W_ACT2, _W_ACT3 = 3, 4, 5, 6
_W_PART0, _W_PART1, _W_PART2, _W_PART3 = 7, 8, 9, 10


def actor_kernel(action_space, inp_ref, w_ref, wl_ref, b_ref, out_ref):
    f32 = jnp.float32
    L = LANE
    A = action_space

    x = inp_ref[:, 0 * L:1 * L]     # trunk input  (lanes >= state_space are 0)
    hx = inp_ref[:, 1 * L:2 * L]    # LSTM hidden  (lanes >= hidden are 0)
    cx = inp_ref[:, 2 * L:3 * L]    # LSTM cell
    u = inp_ref[:, 3 * L:4 * L]     # uniform draw, broadcast across all lanes

    def linear(a, w_idx, b_row):
        return (jnp.dot(a, w_ref[w_idx, :, :], preferred_element_type=f32)
                + b_ref[b_row, :])

    # ---- trunk MLP: 3x (Linear + ReLU) ----
    h = jax.nn.relu(linear(x, _W_TRUNK0, _B_TRUNK0))
    h = jax.nn.relu(linear(h, _W_TRUNK1, _B_TRUNK1))
    h = jax.nn.relu(linear(h, _W_TRUNK2, _B_TRUNK2))

    # ---- LSTMCell (PyTorch gate order i,f,g,o); each gate on a 128-lane block ----
    gates = (jnp.dot(h, wl_ref[0, :, :], preferred_element_type=f32)
             + jnp.dot(hx, wl_ref[1, :, :], preferred_element_type=f32))
    i_g = jax.nn.sigmoid(gates[:, 0 * L:1 * L] + b_ref[_B_LSTM_I, :])
    f_g = jax.nn.sigmoid(gates[:, 1 * L:2 * L] + b_ref[_B_LSTM_F, :])
    g_g = jnp.tanh(gates[:, 2 * L:3 * L] + b_ref[_B_LSTM_G, :])
    o_g = jax.nn.sigmoid(gates[:, 3 * L:4 * L] + b_ref[_B_LSTM_O, :])
    c_new = f_g * cx + i_g * g_g
    h_new = o_g * jnp.tanh(c_new)          # padded lanes stay exactly 0

    # ---- actor head: 3x (Linear + ReLU), Linear, masked softmax over A lanes ----
    a = jax.nn.relu(linear(h_new, _W_ACT0, _B_ACT0))
    a = jax.nn.relu(linear(a, _W_ACT1, _B_ACT1))
    a = jax.nn.relu(linear(a, _W_ACT2, _B_ACT2))
    logits = linear(a, _W_ACT3, _B_ACT3)

    lane = jax.lax.broadcasted_iota(jnp.int32, logits.shape, 1)
    valid = lane < A
    logits = jnp.where(valid, logits, f32(-1e30))
    m = jnp.max(logits, axis=-1, keepdims=True)
    e = jnp.exp(logits - m)                             # padded lanes -> 0
    probs = e / jnp.sum(e, axis=-1, keepdims=True)      # zeros outside [0, A)

    # ---- Categorical(probs).sample() via inverse CDF ----
    # Inclusive prefix sum over the first A lanes: unrolled (A-1)-step roll+add
    # on the XLU.  Lanes >= A hold junk partial sums, so force them out of the
    # comparison with a sentinel before counting.
    cdf = probs
    for s in range(1, A):
        cdf = cdf + pltpu.roll(probs, shift=s, axis=1)
    cdf = jnp.where(valid, cdf, f32(2.0))
    action = jnp.sum((cdf < u).astype(f32), axis=-1, keepdims=True)
    action = jnp.minimum(action, f32(A - 1))            # [TB, 1] float index

    # ---- partial head on cat([h_new, action]): split matmul + scaled row ----
    p = (jnp.dot(h_new, w_ref[_W_PART0, :, :], preferred_element_type=f32)
         + action * b_ref[_B_WP0A, :] + b_ref[_B_PART0, :])
    p = jax.nn.relu(p)
    p = jax.nn.relu(linear(p, _W_PART1, _B_PART1))
    p = jax.nn.relu(linear(p, _W_PART2, _B_PART2))
    # wp3/bp3 are packed so the single partial output lands in lane A.
    partial = jax.nn.sigmoid(linear(p, _W_PART3, _B_PART3))

    # ---- pack both outputs into one lane-dense slab (full-tile store) ----
    out_ref[...] = jnp.where(valid, probs,
                             jnp.where(lane == A, partial, 0.0))


@functools.partial(jax.jit, static_argnames=("action_space",))
def actor_forward(x, hx, cx, u, packed, action_space):
    """Returns (softmax probs [B, A], partial [B, 1])."""
    w_stack, w_lstm, b_all = packed
    L = LANE
    A = action_space
    B = x.shape[0]

    # Pad batch to full sublane tiles; tile over a "parallel" grid axis.
    if B <= L:
        tb = ((B + 7) // 8) * 8
        b_pad = tb
    else:
        tb = L
        b_pad = ((B + L - 1) // L) * L

    # Single lane-dense input slab: [x | hx | cx | u(broadcast)], each 128 lanes.
    slab = jnp.zeros((b_pad, 4 * L), jnp.float32)
    slab = slab.at[:B, 0:x.shape[1]].set(x.astype(jnp.float32))
    slab = slab.at[:B, L:L + hx.shape[1]].set(hx.astype(jnp.float32))
    slab = slab.at[:B, 2 * L:2 * L + cx.shape[1]].set(cx.astype(jnp.float32))
    slab = slab.at[:B, 3 * L:4 * L].set(
        jnp.broadcast_to(u.astype(jnp.float32).reshape(B, 1), (B, L)))

    out = pl.pallas_call(
        functools.partial(actor_kernel, A),
        out_shape=jax.ShapeDtypeStruct((b_pad, L), jnp.float32),
        grid=(b_pad // tb,),
        in_specs=[
            pl.BlockSpec((tb, 4 * L), lambda i: (i, 0)),
            pl.BlockSpec(w_stack.shape, lambda i: (0, 0, 0)),   # resident
            pl.BlockSpec(w_lstm.shape, lambda i: (0, 0, 0)),    # resident
            pl.BlockSpec(b_all.shape, lambda i: (0, 0)),        # resident
        ],
        out_specs=pl.BlockSpec((tb, L), lambda i: (i, 0)),
        compiler_params=pltpu.CompilerParams(
            dimension_semantics=("parallel",)),
    )(slab, w_stack, w_lstm, b_all)

    probs = out[:B, :A]
    partial = out[:B, A:A + 1]
    return probs, partial


# ----------------------------- parameter handling -----------------------------

def _init_linear(key, fan_in, fan_out):
    # PyTorch nn.Linear default init: U(-1/sqrt(fan_in), 1/sqrt(fan_in))
    k1, k2 = jax.random.split(key)
    bound = 1.0 / math.sqrt(fan_in)
    w = jax.random.uniform(k1, (fan_in, fan_out), jnp.float32, -bound, bound)
    b = jax.random.uniform(k2, (1, fan_out), jnp.float32, -bound, bound)
    return w, b


def init_actor_params(key, state_space, action_space, hidden_dim):
    keys = jax.random.split(key, 16)
    params = {}
    # trunk
    params["w0"], params["b0"] = _init_linear(keys[0], state_space, hidden_dim)
    params["w1"], params["b1"] = _init_linear(keys[1], hidden_dim, hidden_dim)
    params["w2"], params["b2"] = _init_linear(keys[2], hidden_dim, hidden_dim)
    # LSTMCell: weights [in, 4*hidden], gate order [i, f, g, o]; U(-1/sqrt(H), 1/sqrt(H))
    bound = 1.0 / math.sqrt(hidden_dim)
    params["wih"] = jax.random.uniform(keys[3], (hidden_dim, 4 * hidden_dim), jnp.float32, -bound, bound)
    params["whh"] = jax.random.uniform(keys[4], (hidden_dim, 4 * hidden_dim), jnp.float32, -bound, bound)
    params["bih"] = jax.random.uniform(keys[5], (1, 4 * hidden_dim), jnp.float32, -bound, bound)
    params["bhh"] = jax.random.uniform(keys[6], (1, 4 * hidden_dim), jnp.float32, -bound, bound)
    # actor head: hidden -> hidden/2 -> hidden/4 -> hidden/8 -> action_space
    d = hidden_dim
    params["wa0"], params["ba0"] = _init_linear(keys[7], d, d // 2); d //= 2
    params["wa1"], params["ba1"] = _init_linear(keys[8], d, d // 2); d //= 2
    params["wa2"], params["ba2"] = _init_linear(keys[9], d, d // 2); d //= 2
    params["wa3"], params["ba3"] = _init_linear(keys[10], d, action_space)
    # partial head: (hidden+1) -> floor(.)/2 chain -> 1
    d = hidden_dim + 1
    wp0, params["bp0"] = _init_linear(keys[11], d, d // 2)
    params["wp0h"] = wp0[:hidden_dim, :]          # part multiplying h
    params["wp0a"] = wp0[hidden_dim:, :]          # part multiplying the action, [1, d//2]
    d = d // 2
    params["wp1"], params["bp1"] = _init_linear(keys[12], d, d // 2); d //= 2
    params["wp2"], params["bp2"] = _init_linear(keys[13], d, d // 2); d //= 2
    params["wp3"], params["bp3"] = _init_linear(keys[14], d, 1)
    return params


def pack_actor_params(params, state_space, action_space, hidden_dim):
    """Packs all weights/biases into 3 lane-dense operands (done once, off the hot path)."""
    L = LANE
    H = hidden_dim
    A = action_space
    assert state_space <= L and H <= L and (A + 1) <= L

    def pad_mat(w):
        out = jnp.zeros((L, L), jnp.float32)
        return out.at[:w.shape[0], :w.shape[1]].set(w.astype(jnp.float32))

    def pad_row(b, col0=0):
        b = jnp.ravel(b).astype(jnp.float32)
        return jnp.zeros((L,), jnp.float32).at[col0:col0 + b.shape[0]].set(b)

    # wp3's single output column is placed at lane A so the packed output slab
    # holds probs in lanes [0, A) and partial in lane A without extra shuffles.
    wp3 = jnp.zeros((L, L), jnp.float32).at[
        :params["wp3"].shape[0], A:A + 1].set(params["wp3"].astype(jnp.float32))

    w_stack = jnp.stack([
        pad_mat(params["w0"]), pad_mat(params["w1"]), pad_mat(params["w2"]),
        pad_mat(params["wa0"]), pad_mat(params["wa1"]),
        pad_mat(params["wa2"]), pad_mat(params["wa3"]),
        pad_mat(params["wp0h"]), pad_mat(params["wp1"]),
        pad_mat(params["wp2"]), wp3,
    ])                                                     # [11, 128, 128]

    def pack_lstm(w):                                      # [H, 4H] -> [128, 512]
        out = jnp.zeros((L, 4 * L), jnp.float32)
        for g in range(4):
            out = out.at[:H, g * L:g * L + H].set(
                w[:, g * H:(g + 1) * H].astype(jnp.float32))
        return out

    w_lstm = jnp.stack([pack_lstm(params["wih"]),
                        pack_lstm(params["whh"])])         # [2, 128, 512]

    b_lstm = (params["bih"] + params["bhh"]).reshape(-1)   # [4H], gate order i,f,g,o
    b_all = jnp.stack([
        pad_row(params["b0"]), pad_row(params["b1"]), pad_row(params["b2"]),
        pad_row(b_lstm[0 * H:1 * H]), pad_row(b_lstm[1 * H:2 * H]),
        pad_row(b_lstm[2 * H:3 * H]), pad_row(b_lstm[3 * H:4 * H]),
        pad_row(params["ba0"]), pad_row(params["ba1"]),
        pad_row(params["ba2"]), pad_row(params["ba3"]),
        pad_row(params["bp0"]), pad_row(params["bp1"]), pad_row(params["bp2"]),
        pad_row(params["bp3"], col0=A),                    # partial bias at lane A
        pad_row(params["wp0a"]),                           # action-weight row
    ])                                                     # [16, 128]
    assert b_all.shape[0] == _N_BIAS_ROWS
    return w_stack, w_lstm, b_all


# ------------------------------ pure-JAX reference ------------------------------

def actor_reference(x, hx, cx, u, params, action_space):
    A = action_space
    relu = jax.nn.relu
    h = relu(x @ params["w0"] + params["b0"])
    h = relu(h @ params["w1"] + params["b1"])
    h = relu(h @ params["w2"] + params["b2"])
    gates = h @ params["wih"] + params["bih"] + hx @ params["whh"] + params["bhh"]
    H = hx.shape[-1]
    i_g = jax.nn.sigmoid(gates[:, 0:H])
    f_g = jax.nn.sigmoid(gates[:, H:2 * H])
    g_g = jnp.tanh(gates[:, 2 * H:3 * H])
    o_g = jax.nn.sigmoid(gates[:, 3 * H:4 * H])
    c = f_g * cx + i_g * g_g
    h_new = o_g * jnp.tanh(c)
    a = relu(h_new @ params["wa0"] + params["ba0"])
    a = relu(a @ params["wa1"] + params["ba1"])
    a = relu(a @ params["wa2"] + params["ba2"])
    probs = jax.nn.softmax(a @ params["wa3"] + params["ba3"], axis=1)
    cdf = jnp.cumsum(probs, axis=1)
    action = jnp.minimum(jnp.sum((cdf < u).astype(jnp.float32), axis=1, keepdims=True),
                         jnp.float32(A - 1))
    p = relu(h_new @ params["wp0h"] + action * params["wp0a"] + params["bp0"])
    p = relu(p @ params["wp1"] + params["bp1"])
    p = relu(p @ params["wp2"] + params["bp2"])
    partial = jax.nn.sigmoid(p @ params["wp3"] + params["bp3"])
    return probs, partial


if __name__ == "__main__":
    B = 2
    STATE_SPACE = 16
    HIDDEN = STATE_SPACE * 2      # default hidden_dim = state_space * 2
    ACTION_SPACE = 4

    root = jax.random.PRNGKey(0)
    k_params, k_x, k_h, k_c, k_u = jax.random.split(root, 5)

    params = init_actor_params(k_params, STATE_SPACE, ACTION_SPACE, HIDDEN)
    packed = pack_actor_params(params, STATE_SPACE, ACTION_SPACE, HIDDEN)

    x = jax.random.normal(k_x, (B, STATE_SPACE), jnp.float32)
    hx = jax.random.normal(k_h, (B, HIDDEN), jnp.float32)
    cx = jax.random.normal(k_c, (B, HIDDEN), jnp.float32)
    # TODO(synk): exact PyTorch RNG stream for Categorical.sample() is not
    # reproducible; we sample via inverse-CDF with a deterministic JAX uniform
    # instead (same distribution).
    u = jax.random.uniform(k_u, (B, 1), jnp.float32)

    out, partial = actor_forward(x, hx, cx, u, packed, action_space=ACTION_SPACE)
    jax.block_until_ready((out, partial))

    assert out.shape == (B, ACTION_SPACE) and partial.shape == (B, 1)
    assert bool(jnp.all(jnp.isfinite(out))) and bool(jnp.all(jnp.isfinite(partial)))
    assert bool(jnp.allclose(jnp.sum(out, axis=1), 1.0, atol=1e-5))
    assert bool(jnp.all((partial > 0.0) & (partial < 1.0)))

    # cross-check against a pure-JAX reference of the same forward pass
    probs_ref, partial_ref = actor_reference(x, hx, cx, u, params, ACTION_SPACE)
    assert bool(jnp.allclose(out, probs_ref, atol=1e-5))
    assert bool(jnp.allclose(partial, partial_ref, atol=1e-4))

    print("KERNEL_OK")
</pallas_src>

<mosaic_0001>
module attributes {stable_mosaic.version = 11 : i64} {
  func.func @actor_kernel(%arg0: i32, %arg1: memref<8x512xf32, #tpu.memory_space<vmem>>, %arg2: memref<11x128x128xf32, #tpu.memory_space<vmem>>, %arg3: memref<2x128x512xf32, #tpu.memory_space<vmem>>, %arg4: memref<16x128xf32, #tpu.memory_space<vmem>>, %arg5: memref<8x128xf32, #tpu.memory_space<vmem>>) attributes {dimension_semantics = [#tpu.dimension_semantics<parallel>], iteration_bounds = array<i64: 1>, scalar_prefetch = 0 : i64, scratch_operands = 0 : i64, tpu.core_type = #tpu.core_type<tc>, window_params = [{transform_indices = @transform_0, window_bounds = array<i64: 8, 512>}, {pipeline_mode = #tpu.pipeline_mode<synchronous>, transform_indices = @transform_1, window_bounds = array<i64: 11, 128, 128>}, {pipeline_mode = #tpu.pipeline_mode<synchronous>, transform_indices = @transform_2, window_bounds = array<i64: 2, 128, 512>}, {pipeline_mode = #tpu.pipeline_mode<synchronous>, transform_indices = @transform_3, window_bounds = array<i64: 16, 128>}, {transform_indices = @transform_4, window_bounds = array<i64: 8, 128>}]} {
    %c0 = arith.constant 0 : index
    %c0_0 = arith.constant 0 : index
    %0 = vector.load %arg1[%c0, %c0_0] : memref<8x512xf32, #tpu.memory_space<vmem>>, vector<8x128xf32>
    %c0_1 = arith.constant 0 : index
    %c128 = arith.constant 128 : index
    %1 = vector.load %arg1[%c0_1, %c128] : memref<8x512xf32, #tpu.memory_space<vmem>>, vector<8x128xf32>
    %c0_2 = arith.constant 0 : index
    %c256 = arith.constant 256 : index
    %2 = vector.load %arg1[%c0_2, %c256] : memref<8x512xf32, #tpu.memory_space<vmem>>, vector<8x128xf32>
    %c0_3 = arith.constant 0 : index
    %c384 = arith.constant 384 : index
    %3 = vector.load %arg1[%c0_3, %c384] : memref<8x512xf32, #tpu.memory_space<vmem>>, vector<8x128xf32>
    %c0_4 = arith.constant 0 : index
    %c0_5 = arith.constant 0 : index
    %c0_6 = arith.constant 0 : index
    %4 = vector.load %arg2[%c0_4, %c0_5, %c0_6] : memref<11x128x128xf32, #tpu.memory_space<vmem>>, vector<1x128x128xf32>
    %5 = vector.shape_cast %4 : vector<1x128x128xf32> to vector<128x128xf32>
    %cst = arith.constant dense<0.000000e+00> : vector<8x128xf32>
    %6 = tpu.matmul %0, %5, %cst {dimension_numbers = #tpu.dot_dimension_numbers<[1], [0], [0], [1], [0, 0, 1, 1], [], []>} : vector<8x128xf32>, vector<128x128xf32>, vector<8x128xf32> -> vector<8x128xf32>
    %c0_7 = arith.constant 0 : index
    %c0_8 = arith.constant 0 : index
    %7 = vector.load %arg4[%c0_7, %c0_8] : memref<16x128xf32, #tpu.memory_space<vmem>>, vector<1x128xf32>
    %8 = vector.shape_cast %7 : vector<1x128xf32> to vector<128xf32>
    %9 = vector.shape_cast %8 : vector<128xf32> to vector<1x128xf32>
    %10 = vector.broadcast %9 : vector<1x128xf32> to vector<8x128xf32>
    %11 = arith.addf %6, %10 : vector<8x128xf32>
    %cst_9 = arith.constant 0.000000e+00 : f32
    %12 = vector.broadcast %cst_9 : f32 to vector<8x128xf32>
    %13 = arith.maximumf %11, %12 : vector<8x128xf32>
    %c1 = arith.constant 1 : index
    %c0_10 = arith.constant 0 : index
    %c0_11 = arith.constant 0 : index
    %14 = vector.load %arg2[%c1, %c0_10, %c0_11] : memref<11x128x128xf32, #tpu.memory_space<vmem>>, vector<1x128x128xf32>
    %15 = vector.shape_cast %14 : vector<1x128x128xf32> to vector<128x128xf32>
    %cst_12 = arith.constant dense<0.000000e+00> : vector<8x128xf32>
    %16 = tpu.matmul %13, %15, %cst_12 {dimension_numbers = #tpu.dot_dimension_numbers<[1], [0], [0], [1], [0, 0, 1, 1], [], []>} : vector<8x128xf32>, vector<128x128xf32>, vector<8x128xf32> -> vector<8x128xf32>
    %c1_13 = arith.constant 1 : index
    %c0_14 = arith.constant 0 : index
    %17 = vector.load %arg4[%c1_13, %c0_14] : memref<16x128xf32, #tpu.memory_space<vmem>>, vector<1x128xf32>
    %18 = vector.shape_cast %17 : vector<1x128xf32> to vector<128xf32>
    %19 = vector.shape_cast %18 : vector<128xf32> to vector<1x128xf32>
    %20 = vector.broadcast %19 : vector<1x128xf32> to vector<8x128xf32>
    %21 = arith.addf %16, %20 : vector<8x128xf32>
    %cst_15 = arith.constant 0.000000e+00 : f32
    %22 = vector.broadcast %cst_15 : f32 to vector<8x128xf32>
    %23 = arith.maximumf %21, %22 : vector<8x128xf32>
    %c2 = arith.constant 2 : index
    %c0_16 = arith.constant 0 : index
    %c0_17 = arith.constant 0 : index
    %24 = vector.load %arg2[%c2, %c0_16, %c0_17] : memref<11x128x128xf32, #tpu.memory_space<vmem>>, vector<1x128x128xf32>
    %25 = vector.shape_cast %24 : vector<1x128x128xf32> to vector<128x128xf32>
    %cst_18 = arith.constant dense<0.000000e+00> : vector<8x128xf32>
    %26 = tpu.matmul %23, %25, %cst_18 {dimension_numbers = #tpu.dot_dimension_numbers<[1], [0], [0], [1], [0, 0, 1, 1], [], []>} : vector<8x128xf32>, vector<128x128xf32>, vector<8x128xf32> -> vector<8x128xf32>
    %c2_19 = arith.constant 2 : index
    %c0_20 = arith.constant 0 : index
    %27 = vector.load %arg4[%c2_19, %c0_20] : memref<16x128xf32, #tpu.memory_space<vmem>>, vector<1x128xf32>
    %28 = vector.shape_cast %27 : vector<1x128xf32> to vector<128xf32>
    %29 = vector.shape_cast %28 : vector<128xf32> to vector<1x128xf32>
    %30 = vector.broadcast %29 : vector<1x128xf32> to vector<8x128xf32>
    %31 = arith.addf %26, %30 : vector<8x128xf32>
    %cst_21 = arith.constant 0.000000e+00 : f32
    %32 = vector.broadcast %cst_21 : f32 to vector<8x128xf32>
    %33 = arith.maximumf %31, %32 : vector<8x128xf32>
    %c0_22 = arith.constant 0 : index
    %c0_23 = arith.constant 0 : index
    %c0_24 = arith.constant 0 : index
    %34 = vector.load %arg3[%c0_22, %c0_23, %c0_24] : memref<2x128x512xf32, #tpu.memory_space<vmem>>, vector<1x128x512xf32>
    %35 = vector.shape_cast %34 : vector<1x128x512xf32> to vector<128x512xf32>
    %cst_25 = arith.constant dense<0.000000e+00> : vector<8x512xf32>
    %36 = tpu.matmul %33, %35, %cst_25 {dimension_numbers = #tpu.dot_dimension_numbers<[1], [0], [0], [1], [0, 0, 1, 1], [], []>} : vector<8x128xf32>, vector<128x512xf32>, vector<8x512xf32> -> vector<8x512xf32>
    %c1_26 = arith.constant 1 : index
    %c0_27 = arith.constant 0 : index
    %c0_28 = arith.constant 0 : index
    %37 = vector.load %arg3[%c1_26, %c0_27, %c0_28] : memref<2x128x512xf32, #tpu.memory_space<vmem>>, vector<1x128x512xf32>
    %38 = vector.shape_cast %37 : vector<1x128x512xf32> to vector<128x512xf32>
    %cst_29 = arith.constant dense<0.000000e+00> : vector<8x512xf32>
    %39 = tpu.matmul %1, %38, %cst_29 {dimension_numbers = #tpu.dot_dimension_numbers<[1], [0], [0], [1], [0, 0, 1, 1], [], []>} : vector<8x128xf32>, vector<128x512xf32>, vector<8x512xf32> -> vector<8x512xf32>
    %40 = arith.addf %36, %39 : vector<8x512xf32>
    %41 = vector.extract_strided_slice %40 {offsets = [0, 0], sizes = [8, 128], strides = [1, 1]} : vector<8x512xf32> to vector<8x128xf32>
    %c3 = arith.constant 3 : index
    %c0_30 = arith.constant 0 : index
    %42 = vector.load %arg4[%c3, %c0_30] : memref<16x128xf32, #tpu.memory_space<vmem>>, vector<1x128xf32>
    %43 = vector.shape_cast %42 : vector<1x128xf32> to vector<128xf32>
    %44 = vector.shape_cast %43 : vector<128xf32> to vector<1x128xf32>
    %45 = vector.broadcast %44 : vector<1x128xf32> to vector<8x128xf32>
    %46 = arith.addf %41, %45 : vector<8x128xf32>
    %47 = arith.negf %46 : vector<8x128xf32>
    %48 = math.exp %47 : vector<8x128xf32>
    %cst_31 = arith.constant 1.000000e+00 : f32
    %49 = vector.broadcast %cst_31 : f32 to vector<8x128xf32>
    %50 = arith.addf %49, %48 : vector<8x128xf32>
    %51 = arith.divf %49, %50 : vector<8x128xf32>
    %52 = vector.extract_strided_slice %40 {offsets = [0, 128], sizes = [8, 128], strides = [1, 1]} : vector<8x512xf32> to vector<8x128xf32>
    %c4 = arith.constant 4 : index
    %c0_32 = arith.constant 0 : index
    %53 = vector.load %arg4[%c4, %c0_32] : memref<16x128xf32, #tpu.memory_space<vmem>>, vector<1x128xf32>
    %54 = vector.shape_cast %53 : vector<1x128xf32> to vector<128xf32>
    %55 = vector.shape_cast %54 : vector<128xf32> to vector<1x128xf32>
    %56 = vector.broadcast %55 : vector<1x128xf32> to vector<8x128xf32>
    %57 = arith.addf %52, %56 : vector<8x128xf32>
    %58 = arith.negf %57 : vector<8x128xf32>
    %59 = math.exp %58 : vector<8x128xf32>
    %cst_33 = arith.constant 1.000000e+00 : f32
    %60 = vector.broadcast %cst_33 : f32 to vector<8x128xf32>
    %61 = arith.addf %60, %59 : vector<8x128xf32>
    %62 = arith.divf %60, %61 : vector<8x128xf32>
    %63 = vector.extract_strided_slice %40 {offsets = [0, 256], sizes = [8, 128], strides = [1, 1]} : vector<8x512xf32> to vector<8x128xf32>
    %c5 = arith.constant 5 : index
    %c0_34 = arith.constant 0 : index
    %64 = vector.load %arg4[%c5, %c0_34] : memref<16x128xf32, #tpu.memory_space<vmem>>, vector<1x128xf32>
    %65 = vector.shape_cast %64 : vector<1x128xf32> to vector<128xf32>
    %66 = vector.shape_cast %65 : vector<128xf32> to vector<1x128xf32>
    %67 = vector.broadcast %66 : vector<1x128xf32> to vector<8x128xf32>
    %68 = arith.addf %63, %67 : vector<8x128xf32>
    %69 = math.tanh %68 : vector<8x128xf32>
    %70 = vector.extract_strided_slice %40 {offsets = [0, 384], sizes = [8, 128], strides = [1, 1]} : vector<8x512xf32> to vector<8x128xf32>
    %c6 = arith.constant 6 : index
    %c0_35 = arith.constant 0 : index
    %71 = vector.load %arg4[%c6, %c0_35] : memref<16x128xf32, #tpu.memory_space<vmem>>, vector<1x128xf32>
    %72 = vector.shape_cast %71 : vector<1x128xf32> to vector<128xf32>
    %73 = vector.shape_cast %72 : vector<128xf32> to vector<1x128xf32>
    %74 = vector.broadcast %73 : vector<1x128xf32> to vector<8x128xf32>
    %75 = arith.addf %70, %74 : vector<8x128xf32>
    %76 = arith.negf %75 : vector<8x128xf32>
    %77 = math.exp %76 : vector<8x128xf32>
    %cst_36 = arith.constant 1.000000e+00 : f32
    %78 = vector.broadcast %cst_36 : f32 to vector<8x128xf32>
    %79 = arith.addf %78, %77 : vector<8x128xf32>
    %80 = arith.divf %78, %79 : vector<8x128xf32>
    %81 = arith.mulf %62, %2 : vector<8x128xf32>
    %82 = arith.mulf %51, %69 : vector<8x128xf32>
    %83 = arith.addf %81, %82 : vector<8x128xf32>
    %84 = math.tanh %83 : vector<8x128xf32>
    %85 = arith.mulf %80, %84 : vector<8x128xf32>
    %c3_37 = arith.constant 3 : index
    %c0_38 = arith.constant 0 : index
    %c0_39 = arith.constant 0 : index
    %86 = vector.load %arg2[%c3_37, %c0_38, %c0_39] : memref<11x128x128xf32, #tpu.memory_space<vmem>>, vector<1x128x128xf32>
    %87 = vector.shape_cast %86 : vector<1x128x128xf32> to vector<128x128xf32>
    %cst_40 = arith.constant dense<0.000000e+00> : vector<8x128xf32>
    %88 = tpu.matmul %85, %87, %cst_40 {dimension_numbers = #tpu.dot_dimension_numbers<[1], [0], [0], [1], [0, 0, 1, 1], [], []>} : vector<8x128xf32>, vector<128x128xf32>, vector<8x128xf32> -> vector<8x128xf32>
    %c7 = arith.constant 7 : index
    %c0_41 = arith.constant 0 : index
    %89 = vector.load %arg4[%c7, %c0_41] : memref<16x128xf32, #tpu.memory_space<vmem>>, vector<1x128xf32>
    %90 = vector.shape_cast %89 : vector<1x128xf32> to vector<128xf32>
    %91 = vector.shape_cast %90 : vector<128xf32> to vector<1x128xf32>
    %92 = vector.broadcast %91 : vector<1x128xf32> to vector<8x128xf32>
    %93 = arith.addf %88, %92 : vector<8x128xf32>
    %cst_42 = arith.constant 0.000000e+00 : f32
    %94 = vector.broadcast %cst_42 : f32 to vector<8x128xf32>
    %95 = arith.maximumf %93, %94 : vector<8x128xf32>
    %c4_43 = arith.constant 4 : index
    %c0_44 = arith.constant 0 : index
    %c0_45 = arith.constant 0 : index
    %96 = vector.load %arg2[%c4_43, %c0_44, %c0_45] : memref<11x128x128xf32, #tpu.memory_space<vmem>>, vector<1x128x128xf32>
    %97 = vector.shape_cast %96 : vector<1x128x128xf32> to vector<128x128xf32>
    %cst_46 = arith.constant dense<0.000000e+00> : vector<8x128xf32>
    %98 = tpu.matmul %95, %97, %cst_46 {dimension_numbers = #tpu.dot_dimension_numbers<[1], [0], [0], [1], [0, 0, 1, 1], [], []>} : vector<8x128xf32>, vector<128x128xf32>, vector<8x128xf32> -> vector<8x128xf32>
    %c8 = arith.constant 8 : index
    %c0_47 = arith.constant 0 : index
    %99 = vector.load %arg4[%c8, %c0_47] : memref<16x128xf32, #tpu.memory_space<vmem>>, vector<1x128xf32>
    %100 = vector.shape_cast %99 : vector<1x128xf32> to vector<128xf32>
    %101 = vector.shape_cast %100 : vector<128xf32> to vector<1x128xf32>
    %102 = vector.broadcast %101 : vector<1x128xf32> to vector<8x128xf32>
    %103 = arith.addf %98, %102 : vector<8x128xf32>
    %cst_48 = arith.constant 0.000000e+00 : f32
    %104 = vector.broadcast %cst_48 : f32 to vector<8x128xf32>
    %105 = arith.maximumf %103, %104 : vector<8x128xf32>
    %c5_49 = arith.constant 5 : index
    %c0_50 = arith.constant 0 : index
    %c0_51 = arith.constant 0 : index
    %106 = vector.load %arg2[%c5_49, %c0_50, %c0_51] : memref<11x128x128xf32, #tpu.memory_space<vmem>>, vector<1x128x128xf32>
    %107 = vector.shape_cast %106 : vector<1x128x128xf32> to vector<128x128xf32>
    %cst_52 = arith.constant dense<0.000000e+00> : vector<8x128xf32>
    %108 = tpu.matmul %105, %107, %cst_52 {dimension_numbers = #tpu.dot_dimension_numbers<[1], [0], [0], [1], [0, 0, 1, 1], [], []>} : vector<8x128xf32>, vector<128x128xf32>, vector<8x128xf32> -> vector<8x128xf32>
    %c9 = arith.constant 9 : index
    %c0_53 = arith.constant 0 : index
    %109 = vector.load %arg4[%c9, %c0_53] : memref<16x128xf32, #tpu.memory_space<vmem>>, vector<1x128xf32>
    %110 = vector.shape_cast %109 : vector<1x128xf32> to vector<128xf32>
    %111 = vector.shape_cast %110 : vector<128xf32> to vector<1x128xf32>
    %112 = vector.broadcast %111 : vector<1x128xf32> to vector<8x128xf32>
    %113 = arith.addf %108, %112 : vector<8x128xf32>
    %cst_54 = arith.constant 0.000000e+00 : f32
    %114 = vector.broadcast %cst_54 : f32 to vector<8x128xf32>
    %115 = arith.maximumf %113, %114 : vector<8x128xf32>
    %c6_55 = arith.constant 6 : index
    %c0_56 = arith.constant 0 : index
    %c0_57 = arith.constant 0 : index
    %116 = vector.load %arg2[%c6_55, %c0_56, %c0_57] : memref<11x128x128xf32, #tpu.memory_space<vmem>>, vector<1x128x128xf32>
    %117 = vector.shape_cast %116 : vector<1x128x128xf32> to vector<128x128xf32>
    %cst_58 = arith.constant dense<0.000000e+00> : vector<8x128xf32>
    %118 = tpu.matmul %115, %117, %cst_58 {dimension_numbers = #tpu.dot_dimension_numbers<[1], [0], [0], [1], [0, 0, 1, 1], [], []>} : vector<8x128xf32>, vector<128x128xf32>, vector<8x128xf32> -> vector<8x128xf32>
    %c10 = arith.constant 10 : index
    %c0_59 = arith.constant 0 : index
    %119 = vector.load %arg4[%c10, %c0_59] : memref<16x128xf32, #tpu.memory_space<vmem>>, vector<1x128xf32>
    %120 = vector.shape_cast %119 : vector<1x128xf32> to vector<128xf32>
    %121 = vector.shape_cast %120 : vector<128xf32> to vector<1x128xf32>
    %122 = vector.broadcast %121 : vector<1x128xf32> to vector<8x128xf32>
    %123 = arith.addf %118, %122 : vector<8x128xf32>
    %124 = tpu.iota {dimensions = array<i32: 1>} : vector<8x128xi32>
    %c4_i32 = arith.constant 4 : i32
    %125 = vector.broadcast %c4_i32 : i32 to vector<8x128xi32>
    %126 = arith.cmpi slt, %124, %125 : vector<8x128xi32>
    %cst_60 = arith.constant -1.000000e+30 : f32
    %127 = vector.broadcast %cst_60 : f32 to vector<8x128xf32>
    %128 = arith.select %126, %123, %127 : vector<8x128xi1>, vector<8x128xf32>
    %cst_61 = arith.constant dense<0xFF800000> : vector<8xf32>
    %129 = vector.multi_reduction <maximumf>, %128, %cst_61 [1] : vector<8x128xf32> to vector<8xf32>
    %130 = vector.shape_cast %129 : vector<8xf32> to vector<8x1xf32>
    %131 = vector.broadcast %130 : vector<8x1xf32> to vector<8x128xf32>
    %132 = arith.subf %128, %131 : vector<8x128xf32>
    %133 = math.exp %132 : vector<8x128xf32>
    %cst_62 = arith.constant dense<0.000000e+00> : vector<8xf32>
    %134 = vector.multi_reduction <add>, %133, %cst_62 [1] : vector<8x128xf32> to vector<8xf32>
    %135 = vector.shape_cast %134 : vector<8xf32> to vector<8x1xf32>
    %136 = vector.broadcast %135 : vector<8x1xf32> to vector<8x128xf32>
    %137 = arith.divf %133, %136 : vector<8x128xf32>
    %c1_i32 = arith.constant 1 : i32
    %138 = tpu.dynamic_rotate %137 by %c1_i32 dim 1 : vector<8x128xf32>, i32 -> vector<8x128xf32>
    %139 = arith.addf %137, %138 : vector<8x128xf32>
    %c2_i32 = arith.constant 2 : i32
    %140 = tpu.dynamic_rotate %137 by %c2_i32 dim 1 : vector<8x128xf32>, i32 -> vector<8x128xf32>
    %141 = arith.addf %139, %140 : vector<8x128xf32>
    %c3_i32 = arith.constant 3 : i32
    %142 = tpu.dynamic_rotate %137 by %c3_i32 dim 1 : vector<8x128xf32>, i32 -> vector<8x128xf32>
    %143 = arith.addf %141, %142 : vector<8x128xf32>
    %cst_63 = arith.constant 2.000000e+00 : f32
    %144 = vector.broadcast %cst_63 : f32 to vector<8x128xf32>
    %145 = arith.select %126, %143, %144 : vector<8x128xi1>, vector<8x128xf32>
    %146 = arith.cmpf olt, %145, %3 : vector<8x128xf32>
    %147 = arith.extui %146 : vector<8x128xi1> to vector<8x128xi32>
    %148 = arith.sitofp %147 : vector<8x128xi32> to vector<8x128xf32>
    %cst_64 = arith.constant dense<0.000000e+00> : vector<8xf32>
    %149 = vector.multi_reduction <add>, %148, %cst_64 [1] : vector<8x128xf32> to vector<8xf32>
    %150 = vector.shape_cast %149 : vector<8xf32> to vector<8x1xf32>
    %cst_65 = arith.constant 3.000000e+00 : f32
    %151 = vector.broadcast %cst_65 : f32 to vector<8x1xf32>
    %152 = arith.minimumf %150, %151 : vector<8x1xf32>
    %c7_66 = arith.constant 7 : index
    %c0_67 = arith.constant 0 : index
    %c0_68 = arith.constant 0 : index
    %153 = vector.load %arg2[%c7_66, %c0_67, %c0_68] : memref<11x128x128xf32, #tpu.memory_space<vmem>>, vector<1x128x128xf32>
    %154 = vector.shape_cast %153 : vector<1x128x128xf32> to vector<128x128xf32>
    %cst_69 = arith.constant dense<0.000000e+00> : vector<8x128xf32>
    %155 = tpu.matmul %85, %154, %cst_69 {dimension_numbers = #tpu.dot_dimension_numbers<[1], [0], [0], [1], [0, 0, 1, 1], [], []>} : vector<8x128xf32>, vector<128x128xf32>, vector<8x128xf32> -> vector<8x128xf32>
    %c15 = arith.constant 15 : index
    %c0_70 = arith.constant 0 : index
    %156 = vector.load %arg4[%c15, %c0_70] : memref<16x128xf32, #tpu.memory_space<vmem>>, vector<1x128xf32>
    %157 = vector.shape_cast %156 : vector<1x128xf32> to vector<128xf32>
    %158 = vector.shape_cast %157 : vector<128xf32> to vector<1x128xf32>
    %159 = vector.broadcast %152 : vector<8x1xf32> to vector<8x128xf32>
    %160 = vector.broadcast %158 : vector<1x128xf32> to vector<8x128xf32>
    %161 = arith.mulf %159, %160 : vector<8x128xf32>
    %162 = arith.addf %155, %161 : vector<8x128xf32>
    %c11 = arith.constant 11 : index
    %c0_71 = arith.constant 0 : index
    %163 = vector.load %arg4[%c11, %c0_71] : memref<16x128xf32, #tpu.memory_space<vmem>>, vector<1x128xf32>
    %164 = vector.shape_cast %163 : vector<1x128xf32> to vector<128xf32>
    %165 = vector.shape_cast %164 : vector<128xf32> to vector<1x128xf32>
    %166 = vector.broadcast %165 : vector<1x128xf32> to vector<8x128xf32>
    %167 = arith.addf %162, %166 : vector<8x128xf32>
    %cst_72 = arith.constant 0.000000e+00 : f32
    %168 = vector.broadcast %cst_72 : f32 to vector<8x128xf32>
    %169 = arith.maximumf %167, %168 : vector<8x128xf32>
    %c8_73 = arith.constant 8 : index
    %c0_74 = arith.constant 0 : index
    %c0_75 = arith.constant 0 : index
    %170 = vector.load %arg2[%c8_73, %c0_74, %c0_75] : memref<11x128x128xf32, #tpu.memory_space<vmem>>, vector<1x128x128xf32>
    %171 = vector.shape_cast %170 : vector<1x128x128xf32> to vector<128x128xf32>
    %cst_76 = arith.constant dense<0.000000e+00> : vector<8x128xf32>
    %172 = tpu.matmul %169, %171, %cst_76 {dimension_numbers = #tpu.dot_dimension_numbers<[1], [0], [0], [1], [0, 0, 1, 1], [], []>} : vector<8x128xf32>, vector<128x128xf32>, vector<8x128xf32> -> vector<8x128xf32>
    %c12 = arith.constant 12 : index
    %c0_77 = arith.constant 0 : index
    %173 = vector.load %arg4[%c12, %c0_77] : memref<16x128xf32, #tpu.memory_space<vmem>>, vector<1x128xf32>
    %174 = vector.shape_cast %173 : vector<1x128xf32> to vector<128xf32>
    %175 = vector.shape_cast %174 : vector<128xf32> to vector<1x128xf32>
    %176 = vector.broadcast %175 : vector<1x128xf32> to vector<8x128xf32>
    %177 = arith.addf %172, %176 : vector<8x128xf32>
    %cst_78 = arith.constant 0.000000e+00 : f32
    %178 = vector.broadcast %cst_78 : f32 to vector<8x128xf32>
    %179 = arith.maximumf %177, %178 : vector<8x128xf32>
    %c9_79 = arith.constant 9 : index
    %c0_80 = arith.constant 0 : index
    %c0_81 = arith.constant 0 : index
    %180 = vector.load %arg2[%c9_79, %c0_80, %c0_81] : memref<11x128x128xf32, #tpu.memory_space<vmem>>, vector<1x128x128xf32>
    %181 = vector.shape_cast %180 : vector<1x128x128xf32> to vector<128x128xf32>
    %cst_82 = arith.constant dense<0.000000e+00> : vector<8x128xf32>
    %182 = tpu.matmul %179, %181, %cst_82 {dimension_numbers = #tpu.dot_dimension_numbers<[1], [0], [0], [1], [0, 0, 1, 1], [], []>} : vector<8x128xf32>, vector<128x128xf32>, vector<8x128xf32> -> vector<8x128xf32>
    %c13 = arith.constant 13 : index
    %c0_83 = arith.constant 0 : index
    %183 = vector.load %arg4[%c13, %c0_83] : memref<16x128xf32, #tpu.memory_space<vmem>>, vector<1x128xf32>
    %184 = vector.shape_cast %183 : vector<1x128xf32> to vector<128xf32>
    %185 = vector.shape_cast %184 : vector<128xf32> to vector<1x128xf32>
    %186 = vector.broadcast %185 : vector<1x128xf32> to vector<8x128xf32>
    %187 = arith.addf %182, %186 : vector<8x128xf32>
    %cst_84 = arith.constant 0.000000e+00 : f32
    %188 = vector.broadcast %cst_84 : f32 to vector<8x128xf32>
    %189 = arith.maximumf %187, %188 : vector<8x128xf32>
    %c10_85 = arith.constant 10 : index
    %c0_86 = arith.constant 0 : index
    %c0_87 = arith.constant 0 : index
    %190 = vector.load %arg2[%c10_85, %c0_86, %c0_87] : memref<11x128x128xf32, #tpu.memory_space<vmem>>, vector<1x128x128xf32>
    %191 = vector.shape_cast %190 : vector<1x128x128xf32> to vector<128x128xf32>
    %cst_88 = arith.constant dense<0.000000e+00> : vector<8x128xf32>
    %192 = tpu.matmul %189, %191, %cst_88 {dimension_numbers = #tpu.dot_dimension_numbers<[1], [0], [0], [1], [0, 0, 1, 1], [], []>} : vector<8x128xf32>, vector<128x128xf32>, vector<8x128xf32> -> vector<8x128xf32>
    %c14 = arith.constant 14 : index
    %c0_89 = arith.constant 0 : index
    %193 = vector.load %arg4[%c14, %c0_89] : memref<16x128xf32, #tpu.memory_space<vmem>>, vector<1x128xf32>
    %194 = vector.shape_cast %193 : vector<1x128xf32> to vector<128xf32>
    %195 = vector.shape_cast %194 : vector<128xf32> to vector<1x128xf32>
    %196 = vector.broadcast %195 : vector<1x128xf32> to vector<8x128xf32>
    %197 = arith.addf %192, %196 : vector<8x128xf32>
    %198 = arith.negf %197 : vector<8x128xf32>
    %199 = math.exp %198 : vector<8x128xf32>
    %cst_90 = arith.constant 1.000000e+00 : f32
    %200 = vector.broadcast %cst_90 : f32 to vector<8x128xf32>
    %201 = arith.addf %200, %199 : vector<8x128xf32>
    %202 = arith.divf %200, %201 : vector<8x128xf32>
    %c4_i32_91 = arith.constant 4 : i32
    %203 = vector.broadcast %c4_i32_91 : i32 to vector<8x128xi32>
    %204 = arith.cmpi eq, %124, %203 : vector<8x128xi32>
    %cst_92 = arith.constant 0.000000e+00 : f32
    %205 = vector.broadcast %cst_92 : f32 to vector<8x128xf32>
    %206 = arith.select %204, %202, %205 : vector<8x128xi1>, vector<8x128xf32>
    %207 = arith.select %126, %137, %206 : vector<8x128xi1>, vector<8x128xf32>
    %c0_93 = arith.constant 0 : index
    %c0_94 = arith.constant 0 : index
    %208 = vector.load %arg5[%c0_93, %c0_94] : memref<8x128xf32, #tpu.memory_space<vmem>>, vector<8x128xf32>
    tpu.vector_store %arg5[%c0_93, %c0_94], %207 {strides = array<i32>} : memref<8x128xf32, #tpu.memory_space<vmem>>, vector<8x128xf32>,
    return
  }
  func.func @transform_0(%arg0: i32) -> (i32, i32) {
    %c0_i32 = arith.constant 0 : i32
    %c0_i32_0 = arith.constant 0 : i32
    return %arg0, %c0_i32 : i32, i32
  }
  func.func @transform_1(%arg0: i32) -> (i32, i32, i32) {
    %c0_i32 = arith.constant 0 : i32
    %c0_i32_0 = arith.constant 0 : i32
    %c0_i32_1 = arith.constant 0 : i32
    %c0_i32_2 = arith.constant 0 : i32
    return %c0_i32, %c0_i32_0, %c0_i32_1 : i32, i32, i32
  }
  func.func @transform_2(%arg0: i32) -> (i32, i32, i32) {
    %c0_i32 = arith.constant 0 : i32
    %c0_i32_0 = arith.constant 0 : i32
    %c0_i32_1 = arith.constant 0 : i32
    %c0_i32_2 = arith.constant 0 : i32
    return %c0_i32, %c0_i32_0, %c0_i32_1 : i32, i32, i32
  }
  func.func @transform_3(%arg0: i32) -> (i32, i32) {
    %c0_i32 = arith.constant 0 : i32
    %c0_i32_0 = arith.constant 0 : i32
    %c0_i32_1 = arith.constant 0 : i32
    return %c0_i32, %c0_i32_0 : i32, i32
  }
  func.func @transform_4(%arg0: i32) -> (i32, i32) {
    %c0_i32 = arith.constant 0 : i32
    %c0_i32_0 = arith.constant 0 : i32
    return %arg0, %c0_i32 : i32, i32
  }
}

</mosaic_0001>

<llo_original>
// kernel: actor_forward.1
$region0: #{actor_forward.1}
  #allocation0 [shape = 'u32[]', space=smem, size = 0x4, offset = 0x4, fixed_abs, tag = 'smem constant byte address 0x4 - core index']
  #allocation1 [shape = 'u32[144,128]{1,0:T(1,128)}', space=vmem, size = 0x12000, scoped, tag = 'internal scratch']
  %s0 = inlined_call_operand.vmem [shape: f32[8,512], index: 0, kind: input, shape index: {}]
  %s1 = inlined_call_operand.hbm [shape: f32[11,128,128], index: 1, kind: input, shape index: {}]
  %s2 = inlined_call_operand.hbm [shape: f32[2,128,512], index: 2, kind: input, shape index: {}]
  %s3 = inlined_call_operand.vmem [shape: f32[16,128], index: 3, kind: input, shape index: {}]
  %s4 = inlined_call_operand.vmem [shape: f32[8,128], index: 4, kind: output, shape index: {}]
  %s5 = sld [smem:[#allocation0]]
  $region34: #{actor_forward.1} parent=0
    _
  %s7 = ssub.s32 1, %s5
  %s8 = scalar_select 0, %s7, %s5
  $region1: #{actor_forward.1} parent=0
    #allocation2 [shape = 'u8[720896]{0}', space=vmem, size = 0xb0000, scoped, tag = 'input window, operand 1, single buffered']
    #allocation3 [shape = 's32[1]{0}', space=sflag, size = 0x4, scoped, tag = 'scoped memory for actor_forward.1']
    #allocation4 [shape = 'u8[524288]{0}', space=vmem, size = 0x80000, scoped, tag = 'input window, operand 2, single buffered']
    #allocation5 [shape = 's32[1]{0}', space=sflag, size = 0x4, scoped, tag = 'scoped memory for actor_forward.1']
    %9 = vsyncpa [#allocation3], 0
    %10 = vsyncpa [#allocation5], 0
    // Predicated region
    $region2: #{actor_forward.1} parent=1 // pred_check
      _
    $region3: #{actor_forward.1} parent=1 // pred_check_branch
      %12 = sbr.rel (0) target = $region5
    $region4: #{actor_forward.1} parent=1 // pred_region
      _
    $region5: #{actor_forward.1} parent=1 // pred_fallthru
      _
    // Predicated region
    $region6: #{actor_forward.1} parent=1 // pred_check
      _
    $region7: #{actor_forward.1} parent=1 // pred_check_branch
      %14 = sbr.rel (0) target = $region9
    $region8: #{actor_forward.1} parent=1 // pred_region
      %s16 = ssub.s32 22528, 22528
      %17 = vsyncadd [#allocation3], %s16
      %s18 = sshll.u32 [#allocation2], 4
      %s19 = int_to_ptr.vmem [resolvable:$true] %s18
      %24 = dma.hbm_to_vmem [thread:$0]  %s1, 22528, %s19, [#allocation3], 128, 128, 8
    $region9: #{actor_forward.1} parent=1 // pred_fallthru
      _
    // Predicated region
    $region10: #{actor_forward.1} parent=1 // pred_check
      _
    $region11: #{actor_forward.1} parent=1 // pred_check_branch
      %26 = sbr.rel (0) target = $region13
    $region12: #{actor_forward.1} parent=1 // pred_region
      %s28 = ssub.s32 16384, 16384
      %29 = vsyncadd [#allocation5], %s28
      %s30 = sshll.u32 [#allocation4], 4
      %s31 = int_to_ptr.vmem [resolvable:$true] %s30
      %36 = dma.hbm_to_vmem [thread:$0]  %s2, 16384, %s31, [#allocation5], 512, 512, 32
    $region13: #{actor_forward.1} parent=1 // pred_fallthru
      _
    // Predicated region
    $region14: #{actor_forward.1} parent=1 // pred_check
      _
    $region15: #{actor_forward.1} parent=1 // pred_check_branch
      %38 = sbr.rel (0) target = $region17
    $region16: #{actor_forward.1} parent=1 // pred_region
      _
    $region17: #{actor_forward.1} parent=1 // pred_fallthru
      _
    // Predicated region
    $region18: #{actor_forward.1} parent=1 // pred_check
      _
    $region19: #{actor_forward.1} parent=1 // pred_check_branch
      %40 = sbr.rel (0) target = $region21
    $region20: #{actor_forward.1} parent=1 // pred_region
      %41 = dma.done [#allocation3], 22528
    $region21: #{actor_forward.1} parent=1 // pred_fallthru
      _
    // Predicated region
    $region22: #{actor_forward.1} parent=1 // pred_check
      _
    $region23: #{actor_forward.1} parent=1 // pred_check_branch
      %43 = sbr.rel (0) target = $region25
    $region24: #{actor_forward.1} parent=1 // pred_region
      %44 = dma.done [#allocation5], 16384
    $region25: #{actor_forward.1} parent=1 // pred_fallthru
      _
    %v45 = vld [vmem:[%s0] sm:$0xff]
    %v46 = vld [vmem:[%s0 + $0x8] sm:$0xff]
    %v47 = vld [vmem:[%s0 + $0x10] sm:$0xff]
    %v48 = vld [vmem:[%s0 + $0x18] sm:$0xff]
    %v49 = vld [vmem:[#allocation2] sm:$0xff]
    %v50 = vld [vmem:[#allocation2 + $0x8] sm:$0xff]
    %v51 = vld [vmem:[#allocation2 + $0x10] sm:$0xff]
    %v52 = vld [vmem:[#allocation2 + $0x18] sm:$0xff]
    %v53 = vld [vmem:[#allocation2 + $0x20] sm:$0xff]
    %v54 = vld [vmem:[#allocation2 + $0x28] sm:$0xff]
    %v55 = vld [vmem:[#allocation2 + $0x30] sm:$0xff]
    %v56 = vld [vmem:[#allocation2 + $0x38] sm:$0xff]
    %v57 = vld [vmem:[#allocation2 + $0x40] sm:$0xff]
    %v58 = vld [vmem:[#allocation2 + $0x48] sm:$0xff]
    %v59 = vld [vmem:[#allocation2 + $0x50] sm:$0xff]
    %v60 = vld [vmem:[#allocation2 + $0x58] sm:$0xff]
    %v61 = vld [vmem:[#allocation2 + $0x60] sm:$0xff]
    %v62 = vld [vmem:[#allocation2 + $0x68] sm:$0xff]
    %v63 = vld [vmem:[#allocation2 + $0x70] sm:$0xff]
    %v64 = vld [vmem:[#allocation2 + $0x78] sm:$0xff]
    %v65 = vld [vmem:[%s3] sm:$0x1]
    %v66 = vlaneseq
    %v67 = vshrl.u32 %v66, 7
    %v68 = vsub.s32 0, %v67
    %v69 = vrot.slane %v65, %v68
    %70 = vmatprep.subr.mxu0 0.0
    %71 = vmatpush1.msra.mxu0 %v49
    %72 = vmatprep.subr.mxu0 0.0
    %73 = vmatpush1.msra.mxu0 %v50
    %74 = vmatprep.subr.mxu0 0.0
    %75 = vmatpush1.msra.mxu0 %v51
    %76 = vmatprep.subr.mxu0 0.0
    %77 = vmatpush1.msra.mxu0 %v52
    %78 = vmatprep.subr.mxu0 0.0
    %79 = vmatpush1.msra.mxu0 %v53
    %80 = vmatprep.subr.mxu0 0.0
    %81 = vmatpush1.msra.mxu0 %v54
    %82 = vmatprep.subr.mxu0 0.0
    %83 = vmatpush1.msra.mxu0 %v55
    %84 = vmatprep.subr.mxu0 0.0
    %85 = vmatpush1.msra.mxu0 %v56
    %86 = vmatprep.subr.mxu0 0.0
    %87 = vmatpush1.msra.mxu0 %v57
    %88 = vmatprep.subr.mxu0 0.0
    %89 = vmatpush1.msra.mxu0 %v58
    %90 = vmatprep.subr.mxu0 0.0
    %91 = vmatpush1.msra.mxu0 %v59
    %92 = vmatprep.subr.mxu0 0.0
    %93 = vmatpush1.msra.mxu0 %v60
    %94 = vmatprep.subr.mxu0 0.0
    %95 = vmatpush1.msra.mxu0 %v61
    %96 = vmatprep.subr.mxu0 0.0
    %97 = vmatpush1.msra.mxu0 %v62
    %98 = vmatprep.subr.mxu0 0.0
    %99 = vmatpush1.msra.mxu0 %v63
    %100 = vmatprep.subr.mxu0 0.0
    %101 = vmatpush1.msra.mxu0 %v64
    %102 = vmatprep.subr.mxu0 0.0
    %103 = vmatpush1.msra.mxu0 0.0
    %104 = vmatprep.subr.mxu0 0.0
    %105 = vmatpush1.msra.mxu0 0.0
    %106 = vmatprep.subr.mxu0 0.0
    %107 = vmatpush1.msra.mxu0 0.0
    %108 = vmatprep.subr.mxu0 0.0
    %109 = vmatpush1.msra.mxu0 0.0
    %110 = vmatprep.subr.mxu0 0.0
    %111 = vmatpush1.msra.mxu0 0.0
    %112 = vmatprep.subr.mxu0 0.0
    %113 = vmatpush1.msra.mxu0 0.0
    %114 = vmatprep.subr.mxu0 0.0
    %115 = vmatpush1.msra.mxu0 0.0
    %116 = vmatprep.subr.mxu0 0.0
    %117 = vmatpush1.msra.mxu0 0.0
    %118 = vmatprep.subr.mxu0 0.0
    %119 = vmatpush1.msra.mxu0 0.0
    %120 = vmatprep.subr.mxu0 0.0
    %121 = vmatpush1.msra.mxu0 0.0
    %122 = vmatprep.subr.mxu0 0.0
    %123 = vmatpush1.msra.mxu0 0.0
    %124 = vmatprep.subr.mxu0 0.0
    %125 = vmatpush1.msra.mxu0 0.0
    %126 = vmatprep.subr.mxu0 0.0
    %127 = vmatpush1.msra.mxu0 0.0
    %128 = vmatprep.subr.mxu0 0.0
    %129 = vmatpush1.msra.mxu0 0.0
    %130 = vmatprep.subr.mxu0 0.0
    %131 = vmatpush1.msra.mxu0 0.0
    %132 = vmatprep.subr.mxu0 0.0
    %133 = vmatpush1.msra.mxu0 0.0
    %134 = vmatprep.mubr.f32.mxu0 0.0
    %135 = vmatmul.mubr.f32.gmra.mrb[0].mxu0 %v45
    %v136 = vpop.f32.mrb[0].mxu0
    %v137 = vadd.f32 %v69, %v136
    %v138 = vpop.f32.mrb[0].mxu0
    %139 = vdwg.mxu0
    %v140 = vmax.f32 %v137, 0.0
    %s141 = scalar_lea.vmem [#allocation2], 128
    %v142 = vld [vmem:[%s141] sm:$0xff]
    %v143 = vld [vmem:[%s141 + $0x8] sm:$0xff]
    %v144 = vld [vmem:[%s141 + $0x10] sm:$0xff]
    %v145 = vld [vmem:[%s141 + $0x18] sm:$0xff]
    %v146 = vld [vmem:[%s141 + $0x20] sm:$0xff]
    %v147 = vld [vmem:[%s141 + $0x28] sm:$0xff]
    %v148 = vld [vmem:[%s141 + $0x30] sm:$0xff]
    %v149 = vld [vmem:[%s141 + $0x38] sm:$0xff]
    %v150 = vld [vmem:[%s141 + $0x40] sm:$0xff]
    %v151 = vld [vmem:[%s141 + $0x48] sm:$0xff]
    %v152 = vld [vmem:[%s141 + $0x50] sm:$0xff]
    %v153 = vld [vmem:[%s141 + $0x58] sm:$0xff]
    %v154 = vld [vmem:[%s141 + $0x60] sm:$0xff]
    %v155 = vld [vmem:[%s141 + $0x68] sm:$0xff]
    %v156 = vld [vmem:[%s141 + $0x70] sm:$0xff]
    %v157 = vld [vmem:[%s141 + $0x78] sm:$0xff]
    %v158 = vld [vmem:[%s3 + $0x1] sm:$0x1]
    %v159 = vlaneseq
    %v160 = vshrl.u32 %v159, 7
    %v161 = vsub.s32 0, %v160
    %v162 = vrot.slane %v158, %v161
    %163 = vmatprep.subr.mxu0 0.0
    %164 = vmatpush1.msra.mxu0 %v142
    %165 = vmatprep.subr.mxu0 0.0
    %166 = vmatpush1.msra.mxu0 %v143
    %167 = vmatprep.subr.mxu0 0.0
    %168 = vmatpush1.msra.mxu0 %v144
    %169 = vmatprep.subr.mxu0 0.0
    %170 = vmatpush1.msra.mxu0 %v145
    %171 = vmatprep.subr.mxu0 0.0
    %172 = vmatpush1.msra.mxu0 %v146
    %173 = vmatprep.subr.mxu0 0.0
    %174 = vmatpush1.msra.mxu0 %v147
    %175 = vmatprep.subr.mxu0 0.0
    %176 = vmatpush1.msra.mxu0 %v148
    %177 = vmatprep.subr.mxu0 0.0
    %178 = vmatpush1.msra.mxu0 %v149
    %179 = vmatprep.subr.mxu0 0.0
    %180 = vmatpush1.msra.mxu0 %v150
    %181 = vmatprep.subr.mxu0 0.0
    %182 = vmatpush1.msra.mxu0 %v151
    %183 = vmatprep.subr.mxu0 0.0
    %184 = vmatpush1.msra.mxu0 %v152
    %185 = vmatprep.subr.mxu0 0.0
    %186 = vmatpush1.msra.mxu0 %v153
    %187 = vmatprep.subr.mxu0 0.0
    %188 = vmatpush1.msra.mxu0 %v154
    %189 = vmatprep.subr.mxu0 0.0
    %190 = vmatpush1.msra.mxu0 %v155
    %191 = vmatprep.subr.mxu0 0.0
    %192 = vmatpush1.msra.mxu0 %v156
    %193 = vmatprep.subr.mxu0 0.0
    %194 = vmatpush1.msra.mxu0 %v157
    %195 = vmatprep.subr.mxu0 0.0
    %196 = vmatpush1.msra.mxu0 0.0
    %197 = vmatprep.subr.mxu0 0.0
    %198 = vmatpush1.msra.mxu0 0.0
    %199 = vmatprep.subr.mxu0 0.0
    %200 = vmatpush1.msra.mxu0 0.0
    %201 = vmatprep.subr.mxu0 0.0
    %202 = vmatpush1.msra.mxu0 0.0
    %203 = vmatprep.subr.mxu0 0.0
    %204 = vmatpush1.msra.mxu0 0.0
    %205 = vmatprep.subr.mxu0 0.0
    %206 = vmatpush1.msra.mxu0 0.0
    %207 = vmatprep.subr.mxu0 0.0
    %208 = vmatpush1.msra.mxu0 0.0
    %209 = vmatprep.subr.mxu0 0.0
    %210 = vmatpush1.msra.mxu0 0.0
    %211 = vmatprep.subr.mxu0 0.0
    %212 = vmatpush1.msra.mxu0 0.0
    %213 = vmatprep.subr.mxu0 0.0
    %214 = vmatpush1.msra.mxu0 0.0
    %215 = vmatprep.subr.mxu0 0.0
    %216 = vmatpush1.msra.mxu0 0.0
    %217 = vmatprep.subr.mxu0 0.0
    %218 = vmatpush1.msra.mxu0 0.0
    %219 = vmatprep.subr.mxu0 0.0
    %220 = vmatpush1.msra.mxu0 0.0
    %221 = vmatprep.subr.mxu0 0.0
    %222 = vmatpush1.msra.mxu0 0.0
    %223 = vmatprep.subr.mxu0 0.0
    %224 = vmatpush1.msra.mxu0 0.0
    %225 = vmatprep.subr.mxu0 0.0
    %226 = vmatpush1.msra.mxu0 0.0
    %227 = vmatprep.mubr.f32.mxu0 0.0
    %228 = vmatmul.mubr.f32.gmra.mrb[0].mxu0 %v140
    %v229 = vpop.f32.mrb[0].mxu0
    %v230 = vadd.f32 %v162, %v229
    %v231 = vpop.f32.mrb[0].mxu0
    %232 = vdwg.mxu0
    %v233 = vmax.f32 %v230, 0.0
    %s234 = scalar_lea.vmem [#allocation2], 256
    %v235 = vld [vmem:[%s234] sm:$0xff]
    %v236 = vld [vmem:[%s234 + $0x8] sm:$0xff]
    %v237 = vld [vmem:[%s234 + $0x10] sm:$0xff]
    %v238 = vld [vmem:[%s234 + $0x18] sm:$0xff]
    %v239 = vld [vmem:[%s234 + $0x20] sm:$0xff]
    %v240 = vld [vmem:[%s234 + $0x28] sm:$0xff]
    %v241 = vld [vmem:[%s234 + $0x30] sm:$0xff]
    %v242 = vld [vmem:[%s234 + $0x38] sm:$0xff]
    %v243 = vld [vmem:[%s234 + $0x40] sm:$0xff]
    %v244 = vld [vmem:[%s234 + $0x48] sm:$0xff]
    %v245 = vld [vmem:[%s234 + $0x50] sm:$0xff]
    %v246 = vld [vmem:[%s234 + $0x58] sm:$0xff]
    %v247 = vld [vmem:[%s234 + $0x60] sm:$0xff]
    %v248 = vld [vmem:[%s234 + $0x68] sm:$0xff]
    %v249 = vld [vmem:[%s234 + $0x70] sm:$0xff]
    %v250 = vld [vmem:[%s234 + $0x78] sm:$0xff]
    %v251 = vld [vmem:[%s3 + $0x2] sm:$0x1]
    %v252 = vlaneseq
    %v253 = vshrl.u32 %v252, 7
    %v254 = vsub.s32 0, %v253
    %v255 = vrot.slane %v251, %v254
    %256 = vmatprep.subr.mxu0 0.0
    %257 = vmatpush1.msra.mxu0 %v235
    %258 = vmatprep.subr.mxu0 0.0
    %259 = vmatpush1.msra.mxu0 %v236
    %260 = vmatprep.subr.mxu0 0.0
    %261 = vmatpush1.msra.mxu0 %v237
    %262 = vmatprep.subr.mxu0 0.0
    %263 = vmatpush1.msra.mxu0 %v238
    %264 = vmatprep.subr.mxu0 0.0
    %265 = vmatpush1.msra.mxu0 %v239
    %266 = vmatprep.subr.mxu0 0.0
    %267 = vmatpush1.msra.mxu0 %v240
    %268 = vmatprep.subr.mxu0 0.0
    %269 = vmatpush1.msra.mxu0 %v241
    %270 = vmatprep.subr.mxu0 0.0
    %271 = vmatpush1.msra.mxu0 %v242
    %272 = vmatprep.subr.mxu0 0.0
    %273 = vmatpush1.msra.mxu0 %v243
    %274 = vmatprep.subr.mxu0 0.0
    %275 = vmatpush1.msra.mxu0 %v244
    %276 = vmatprep.subr.mxu0 0.0
    %277 = vmatpush1.msra.mxu0 %v245
    %278 = vmatprep.subr.mxu0 0.0
    %279 = vmatpush1.msra.mxu0 %v246
    %280 = vmatprep.subr.mxu0 0.0
    %281 = vmatpush1.msra.mxu0 %v247
    %282 = vmatprep.subr.mxu0 0.0
    %283 = vmatpush1.msra.mxu0 %v248
    %284 = vmatprep.subr.mxu0 0.0
    %285 = vmatpush1.msra.mxu0 %v249
    %286 = vmatprep.subr.mxu0 0.0
    %287 = vmatpush1.msra.mxu0 %v250
    %288 = vmatprep.subr.mxu0 0.0
    %289 = vmatpush1.msra.mxu0 0.0
    %290 = vmatprep.subr.mxu0 0.0
    %291 = vmatpush1.msra.mxu0 0.0
    %292 = vmatprep.subr.mxu0 0.0
    %293 = vmatpush1.msra.mxu0 0.0
    %294 = vmatprep.subr.mxu0 0.0
    %295 = vmatpush1.msra.mxu0 0.0
    %296 = vmatprep.subr.mxu0 0.0
    %297 = vmatpush1.msra.mxu0 0.0
    %298 = vmatprep.subr.mxu0 0.0
    %299 = vmatpush1.msra.mxu0 0.0
    %300 = vmatprep.subr.mxu0 0.0
    %301 = vmatpush1.msra.mxu0 0.0
    %302 = vmatprep.subr.mxu0 0.0
    %303 = vmatpush1.msra.mxu0 0.0
    %304 = vmatprep.subr.mxu0 0.0
    %305 = vmatpush1.msra.mxu0 0.0
    %306 = vmatprep.subr.mxu0 0.0
    %307 = vmatpush1.msra.mxu0 0.0
    %308 = vmatprep.subr.mxu0 0.0
    %309 = vmatpush1.msra.mxu0 0.0
    %310 = vmatprep.subr.mxu0 0.0
    %311 = vmatpush1.msra.mxu0 0.0
    %312 = vmatprep.subr.mxu0 0.0
    %313 = vmatpush1.msra.mxu0 0.0
    %314 = vmatprep.subr.mxu0 0.0
    %315 = vmatpush1.msra.mxu0 0.0
    %316 = vmatprep.subr.mxu0 0.0
    %317 = vmatpush1.msra.mxu0 0.0
    %318 = vmatprep.subr.mxu0 0.0
    %319 = vmatpush1.msra.mxu0 0.0
    %320 = vmatprep.mubr.f32.mxu0 0.0
    %321 = vmatmul.mubr.f32.gmra.mrb[0].mxu0 %v233
    %v322 = vpop.f32.mrb[0].mxu0
    %v323 = vadd.f32 %v255, %v322
    %v324 = vpop.f32.mrb[0].mxu0
    %325 = vdwg.mxu0
    %v326 = vmax.f32 %v323, 0.0
    %v327 = vld [vmem:[#allocation4] sm:$0xff]
    %v328 = vld [vmem:[#allocation4 + $0x8] sm:$0xff]
    %v329 = vld [vmem:[#allocation4 + $0x10] sm:$0xff]
    %v330 = vld [vmem:[#allocation4 + $0x18] sm:$0xff]
    %v331 = vld [vmem:[#allocation4 + $0x20] sm:$0xff]
    %v332 = vld [vmem:[#allocation4 + $0x28] sm:$0xff]
    %v333 = vld [vmem:[#allocation4 + $0x30] sm:$0xff]
    %v334 = vld [vmem:[#allocation4 + $0x38] sm:$0xff]
    %v335 = vld [vmem:[#allocation4 + $0x40] sm:$0xff]
    %v336 = vld [vmem:[#allocation4 + $0x48] sm:$0xff]
    %v337 = vld [vmem:[#allocation4 + $0x50] sm:$0xff]
    %v338 = vld [vmem:[#allocation4 + $0x58] sm:$0xff]
    %v339 = vld [vmem:[#allocation4 + $0x60] sm:$0xff]
    %v340 = vld [vmem:[#allocation4 + $0x68] sm:$0xff]
    %v341 = vld [vmem:[#allocation4 + $0x70] sm:$0xff]
    %v342 = vld [vmem:[#allocation4 + $0x78] sm:$0xff]
    %v343 = vld [vmem:[#allocation4 + $0x80] sm:$0xff]
    %v344 = vld [vmem:[#allocation4 + $0x88] sm:$0xff]
    %v345 = vld [vmem:[#allocation4 + $0x90] sm:$0xff]
    %v346 = vld [vmem:[#allocation4 + $0x98] sm:$0xff]
    %v347 = vld [vmem:[#allocation4 + $0xa0] sm:$0xff]
    %v348 = vld [vmem:[#allocation4 + $0xa8] sm:$0xff]
    %v349 = vld [vmem:[#allocation4 + $0xb0] sm:$0xff]
    %v350 = vld [vmem:[#allocation4 + $0xb8] sm:$0xff]
    %v351 = vld [vmem:[#allocation4 + $0xc0] sm:$0xff]
    %v352 = vld [vmem:[#allocation4 + $0xc8] sm:$0xff]
    %v353 = vld [vmem:[#allocation4 + $0xd0] sm:$0xff]
    %v354 = vld [vmem:[#allocation4 + $0xd8] sm:$0xff]
    %v355 = vld [vmem:[#allocation4 + $0xe0] sm:$0xff]
    %v356 = vld [vmem:[#allocation4 + $0xe8] sm:$0xff]
    %v357 = vld [vmem:[#allocation4 + $0xf0] sm:$0xff]
    %v358 = vld [vmem:[#allocation4 + $0xf8] sm:$0xff]
    %v359 = vld [vmem:[#allocation4 + $0x100] sm:$0xff]
    %v360 = vld [vmem:[#allocation4 + $0x108] sm:$0xff]
    %v361 = vld [vmem:[#allocation4 + $0x110] sm:$0xff]
    %v362 = vld [vmem:[#allocation4 + $0x118] sm:$0xff]
    %v363 = vld [vmem:[#allocation4 + $0x120] sm:$0xff]
    %v364 = vld [vmem:[#allocation4 + $0x128] sm:$0xff]
    %v365 = vld [vmem:[#allocation4 + $0x130] sm:$0xff]
    %v366 = vld [vmem:[#allocation4 + $0x138] sm:$0xff]
    %v367 = vld [vmem:[#allocation4 + $0x140] sm:$0xff]
    %v368 = vld [vmem:[#allocation4 + $0x148] sm:$0xff]
    %v369 = vld [vmem:[#allocation4 + $0x150] sm:$0xff]
    %v370 = vld [vmem:[#allocation4 + $0x158] sm:$0xff]
    %v371 = vld [vmem:[#allocation4 + $0x160] sm:$0xff]
    %v372 = vld [vmem:[#allocation4 + $0x168] sm:$0xff]
    %v373 = vld [vmem:[#allocation4 + $0x170] sm:$0xff]
    %v374 = vld [vmem:[#allocation4 + $0x178] sm:$0xff]
    %v375 = vld [vmem:[#allocation4 + $0x180] sm:$0xff]
    %v376 = vld [vmem:[#allocation4 + $0x188] sm:$0xff]
    %v377 = vld [vmem:[#allocation4 + $0x190] sm:$0xff]
    %v378 = vld [vmem:[#allocation4 + $0x198] sm:$0xff]
    %v379 = vld [vmem:[#allocation4 + $0x1a0] sm:$0xff]
    %v380 = vld [vmem:[#allocation4 + $0x1a8] sm:$0xff]
    %v381 = vld [vmem:[#allocation4 + $0x1b0] sm:$0xff]
    %v382 = vld [vmem:[#allocation4 + $0x1b8] sm:$0xff]
    %v383 = vld [vmem:[#allocation4 + $0x1c0] sm:$0xff]
    %v384 = vld [vmem:[#allocation4 + $0x1c8] sm:$0xff]
    %v385 = vld [vmem:[#allocation4 + $0x1d0] sm:$0xff]
    %v386 = vld [vmem:[#allocation4 + $0x1d8] sm:$0xff]
    %v387 = vld [vmem:[#allocation4 + $0x1e0] sm:$0xff]
    %v388 = vld [vmem:[#allocation4 + $0x1e8] sm:$0xff]
    %v389 = vld [vmem:[#allocation4 + $0x1f0] sm:$0xff]
    %v390 = vld [vmem:[#allocation4 + $0x1f8] sm:$0xff]
    %s391 = scalar_lea.vmem [#allocation4], 512
    %v392 = vld [vmem:[%s391] sm:$0xff]
    %v393 = vld [vmem:[%s391 + $0x8] sm:$0xff]
    %v394 = vld [vmem:[%s391 + $0x10] sm:$0xff]
    %v395 = vld [vmem:[%s391 + $0x18] sm:$0xff]
    %v396 = vld [vmem:[%s391 + $0x20] sm:$0xff]
    %v397 = vld [vmem:[%s391 + $0x28] sm:$0xff]
    %v398 = vld [vmem:[%s391 + $0x30] sm:$0xff]
    %v399 = vld [vmem:[%s391 + $0x38] sm:$0xff]
    %v400 = vld [vmem:[%s391 + $0x40] sm:$0xff]
    %v401 = vld [vmem:[%s391 + $0x48] sm:$0xff]
    %v402 = vld [vmem:[%s391 + $0x50] sm:$0xff]
    %v403 = vld [vmem:[%s391 + $0x58] sm:$0xff]
    %v404 = vld [vmem:[%s391 + $0x60] sm:$0xff]
    %v405 = vld [vmem:[%s391 + $0x68] sm:$0xff]
    %v406 = vld [vmem:[%s391 + $0x70] sm:$0xff]
    %v407 = vld [vmem:[%s391 + $0x78] sm:$0xff]
    %v408 = vld [vmem:[%s391 + $0x80] sm:$0xff]
    %v409 = vld [vmem:[%s391 + $0x88] sm:$0xff]
    %v410 = vld [vmem:[%s391 + $0x90] sm:$0xff]
    %v411 = vld [vmem:[%s391 + $0x98] sm:$0xff]
    %v412 = vld [vmem:[%s391 + $0xa0] sm:$0xff]
    %v413 = vld [vmem:[%s391 + $0xa8] sm:$0xff]
    %v414 = vld [vmem:[%s391 + $0xb0] sm:$0xff]
    %v415 = vld [vmem:[%s391 + $0xb8] sm:$0xff]
    %v416 = vld [vmem:[%s391 + $0xc0] sm:$0xff]
    %v417 = vld [vmem:[%s391 + $0xc8] sm:$0xff]
    %v418 = vld [vmem:[%s391 + $0xd0] sm:$0xff]
    %v419 = vld [vmem:[%s391 + $0xd8] sm:$0xff]
    %v420 = vld [vmem:[%s391 + $0xe0] sm:$0xff]
    %v421 = vld [vmem:[%s391 + $0xe8] sm:$0xff]
    %v422 = vld [vmem:[%s391 + $0xf0] sm:$0xff]
    %v423 = vld [vmem:[%s391 + $0xf8] sm:$0xff]
    %v424 = vld [vmem:[%s391 + $0x100] sm:$0xff]
    %v425 = vld [vmem:[%s391 + $0x108] sm:$0xff]
    %v426 = vld [vmem:[%s391 + $0x110] sm:$0xff]
    %v427 = vld [vmem:[%s391 + $0x118] sm:$0xff]
    %v428 = vld [vmem:[%s391 + $0x120] sm:$0xff]
    %v429 = vld [vmem:[%s391 + $0x128] sm:$0xff]
    %v430 = vld [vmem:[%s391 + $0x130] sm:$0xff]
    %v431 = vld [vmem:[%s391 + $0x138] sm:$0xff]
    %v432 = vld [vmem:[%s391 + $0x140] sm:$0xff]
    %v433 = vld [vmem:[%s391 + $0x148] sm:$0xff]
    %v434 = vld [vmem:[%s391 + $0x150] sm:$0xff]
    %v435 = vld [vmem:[%s391 + $0x158] sm:$0xff]
    %v436 = vld [vmem:[%s391 + $0x160] sm:$0xff]
    %v437 = vld [vmem:[%s391 + $0x168] sm:$0xff]
    %v438 = vld [vmem:[%s391 + $0x170] sm:$0xff]
    %v439 = vld [vmem:[%s391 + $0x178] sm:$0xff]
    %v440 = vld [vmem:[%s391 + $0x180] sm:$0xff]
    %v441 = vld [vmem:[%s391 + $0x188] sm:$0xff]
    %v442 = vld [vmem:[%s391 + $0x190] sm:$0xff]
    %v443 = vld [vmem:[%s391 + $0x198] sm:$0xff]
    %v444 = vld [vmem:[%s391 + $0x1a0] sm:$0xff]
    %v445 = vld [vmem:[%s391 + $0x1a8] sm:$0xff]
    %v446 = vld [vmem:[%s391 + $0x1b0] sm:$0xff]
    %v447 = vld [vmem:[%s391 + $0x1b8] sm:$0xff]
    %v448 = vld [vmem:[%s391 + $0x1c0] sm:$0xff]
    %v449 = vld [vmem:[%s391 + $0x1c8] sm:$0xff]
    %v450 = vld [vmem:[%s391 + $0x1d0] sm:$0xff]
    %v451 = vld [vmem:[%s391 + $0x1d8] sm:$0xff]
    %v452 = vld [vmem:[%s391 + $0x1e0] sm:$0xff]
    %v453 = vld [vmem:[%s391 + $0x1e8] sm:$0xff]
    %v454 = vld [vmem:[%s391 + $0x1f0] sm:$0xff]
    %v455 = vld [vmem:[%s391 + $0x1f8] sm:$0xff]
    %456 = vmatprep.subr.mxu0 %v393
    %457 = vmatpush1.msra.mxu0 %v392
    %458 = vmatprep.subr.mxu0 %v397
    %459 = vmatpush1.msra.mxu0 %v396
    %460 = vmatprep.subr.mxu0 %v401
    %461 = vmatpush1.msra.mxu0 %v400
    %462 = vmatprep.subr.mxu0 %v405
    %463 = vmatpush1.msra.mxu0 %v404
    %464 = vmatprep.subr.mxu0 %v409
    %465 = vmatpush1.msra.mxu0 %v408
    %466 = vmatprep.subr.mxu0 %v413
    %467 = vmatpush1.msra.mxu0 %v412
    %468 = vmatprep.subr.mxu0 %v417
    %469 = vmatpush1.msra.mxu0 %v416
    %470 = vmatprep.subr.mxu0 %v421
    %471 = vmatpush1.msra.mxu0 %v420
    %472 = vmatprep.subr.mxu0 %v425
    %473 = vmatpush1.msra.mxu0 %v424
    %474 = vmatprep.subr.mxu0 %v429
    %475 = vmatpush1.msra.mxu0 %v428
    %476 = vmatprep.subr.mxu0 %v433
    %477 = vmatpush1.msra.mxu0 %v432
    %478 = vmatprep.subr.mxu0 %v437
    %479 = vmatpush1.msra.mxu0 %v436
    %480 = vmatprep.subr.mxu0 %v441
    %481 = vmatpush1.msra.mxu0 %v440
    %482 = vmatprep.subr.mxu0 %v445
    %483 = vmatpush1.msra.mxu0 %v444
    %484 = vmatprep.subr.mxu0 %v449
    %485 = vmatpush1.msra.mxu0 %v448
    %486 = vmatprep.subr.mxu0 %v453
    %487 = vmatpush1.msra.mxu0 %v452
    %488 = vmatprep.subr.mxu0 0.0
    %489 = vmatpush1.msra.mxu0 0.0
    %490 = vmatprep.subr.mxu0 0.0
    %491 = vmatpush1.msra.mxu0 0.0
    %492 = vmatprep.subr.mxu0 0.0
    %493 = vmatpush1.msra.mxu0 0.0
    %494 = vmatprep.subr.mxu0 0.0
    %495 = vmatpush1.msra.mxu0 0.0
    %496 = vmatprep.subr.mxu0 0.0
    %497 = vmatpush1.msra.mxu0 0.0
    %498 = vmatprep.subr.mxu0 0.0
    %499 = vmatpush1.msra.mxu0 0.0
    %500 = vmatprep.subr.mxu0 0.0
    %501 = vmatpush1.msra.mxu0 0.0
    %502 = vmatprep.subr.mxu0 0.0
    %503 = vmatpush1.msra.mxu0 0.0
    %504 = vmatprep.subr.mxu0 0.0
    %505 = vmatpush1.msra.mxu0 0.0
    %506 = vmatprep.subr.mxu0 0.0
    %507 = vmatpush1.msra.mxu0 0.0
    %508 = vmatprep.subr.mxu0 0.0
    %509 = vmatpush1.msra.mxu0 0.0
    %510 = vmatprep.subr.mxu0 0.0
    %511 = vmatpush1.msra.mxu0 0.0
    %512 = vmatprep.subr.mxu0 0.0
    %513 = vmatpush1.msra.mxu0 0.0
    %514 = vmatprep.subr.mxu0 0.0
    %515 = vmatpush1.msra.mxu0 0.0
    %516 = vmatprep.subr.mxu0 0.0
    %517 = vmatpush1.msra.mxu0 0.0
    %518 = vmatprep.subr.mxu0 0.0
    %519 = vmatpush1.msra.mxu0 0.0
    %520 = vmatprep.mubr.f32.mxu0 0.0
    %521 = vmatmul.mubr.f32.gmra.mrb[0].mxu0 %v46
    %v522 = vpop.f32.mrb[0].mxu0
    %v523 = vadd.f32 0.0, %v522
    %v524 = vpop.f32.mrb[0].mxu0
    %v525 = vadd.f32 0.0, %v524
    %526 = vdwg.mxu0
    %527 = vmatprep.subr.mxu0 %v395
    %528 = vmatpush1.msra.mxu0 %v394
    %529 = vmatprep.subr.mxu0 %v399
    %530 = vmatpush1.msra.mxu0 %v398
    %531 = vmatprep.subr.mxu0 %v403
    %532 = vmatpush1.msra.mxu0 %v402
    %533 = vmatprep.subr.mxu0 %v407
    %534 = vmatpush1.msra.mxu0 %v406
    %535 = vmatprep.subr.mxu0 %v411
    %536 = vmatpush1.msra.mxu0 %v410
    %537 = vmatprep.subr.mxu0 %v415
    %538 = vmatpush1.msra.mxu0 %v414
    %539 = vmatprep.subr.mxu0 %v419
    %540 = vmatpush1.msra.mxu0 %v418
    %541 = vmatprep.subr.mxu0 %v423
    %542 = vmatpush1.msra.mxu0 %v422
    %543 = vmatprep.subr.mxu0 %v427
    %544 = vmatpush1.msra.mxu0 %v426
    %545 = vmatprep.subr.mxu0 %v431
    %546 = vmatpush1.msra.mxu0 %v430
    %547 = vmatprep.subr.mxu0 %v435
    %548 = vmatpush1.msra.mxu0 %v434
    %549 = vmatprep.subr.mxu0 %v439
    %550 = vmatpush1.msra.mxu0 %v438
    %551 = vmatprep.subr.mxu0 %v443
    %552 = vmatpush1.msra.mxu0 %v442
    %553 = vmatprep.subr.mxu0 %v447
    %554 = vmatpush1.msra.mxu0 %v446
    %555 = vmatprep.subr.mxu0 %v451
    %556 = vmatpush1.msra.mxu0 %v450
    %557 = vmatprep.subr.mxu0 %v455
    %558 = vmatpush1.msra.mxu0 %v454
    %559 = vmatprep.subr.mxu0 0.0
    %560 = vmatpush1.msra.mxu0 0.0
    %561 = vmatprep.subr.mxu0 0.0
    %562 = vmatpush1.msra.mxu0 0.0
    %563 = vmatprep.subr.mxu0 0.0
    %564 = vmatpush1.msra.mxu0 0.0
    %565 = vmatprep.subr.mxu0 0.0
    %566 = vmatpush1.msra.mxu0 0.0
    %567 = vmatprep.subr.mxu0 0.0
    %568 = vmatpush1.msra.mxu0 0.0
    %569 = vmatprep.subr.mxu0 0.0
    %570 = vmatpush1.msra.mxu0 0.0
    %571 = vmatprep.subr.mxu0 0.0
    %572 = vmatpush1.msra.mxu0 0.0
    %573 = vmatprep.subr.mxu0 0.0
    %574 = vmatpush1.msra.mxu0 0.0
    %575 = vmatprep.subr.mxu0 0.0
    %576 = vmatpush1.msra.mxu0 0.0
    %577 = vmatprep.subr.mxu0 0.0
    %578 = vmatpush1.msra.mxu0 0.0
    %579 = vmatprep.subr.mxu0 0.0
    %580 = vmatpush1.msra.mxu0 0.0
    %581 = vmatprep.subr.mxu0 0.0
    %582 = vmatpush1.msra.mxu0 0.0
    %583 = vmatprep.subr.mxu0 0.0
    %584 = vmatpush1.msra.mxu0 0.0
    %585 = vmatprep.subr.mxu0 0.0
    %586 = vmatpush1.msra.mxu0 0.0
    %587 = vmatprep.subr.mxu0 0.0
    %588 = vmatpush1.msra.mxu0 0.0
    %589 = vmatprep.subr.mxu0 0.0
    %590 = vmatpush1.msra.mxu0 0.0
    %591 = vmatprep.mubr.f32.mxu0 0.0
    %592 = vmatmul.mubr.f32.gmra.mrb[0].mxu0 %v46
    %v593 = vpop.f32.mrb[0].mxu0
    %v594 = vadd.f32 0.0, %v593
    %v595 = vpop.f32.mrb[0].mxu0
    %v596 = vadd.f32 0.0, %v595
    %597 = vdwg.mxu0
    %598 = vmatprep.subr.mxu0 %v328
    %599 = vmatpush1.msra.mxu0 %v327
    %600 = vmatprep.subr.mxu0 %v332
    %601 = vmatpush1.msra.mxu0 %v331
    %602 = vmatprep.subr.mxu0 %v336
    %603 = vmatpush1.msra.mxu0 %v335
    %604 = vmatprep.subr.mxu0 %v340
    %605 = vmatpush1.msra.mxu0 %v339
    %606 = vmatprep.subr.mxu0 %v344
    %607 = vmatpush1.msra.mxu0 %v343
    %608 = vmatprep.subr.mxu0 %v348
    %609 = vmatpush1.msra.mxu0 %v347
    %610 = vmatprep.subr.mxu0 %v352
    %611 = vmatpush1.msra.mxu0 %v351
    %612 = vmatprep.subr.mxu0 %v356
    %613 = vmatpush1.msra.mxu0 %v355
    %614 = vmatprep.subr.mxu0 %v360
    %615 = vmatpush1.msra.mxu0 %v359
    %616 = vmatprep.subr.mxu0 %v364
    %617 = vmatpush1.msra.mxu0 %v363
    %618 = vmatprep.subr.mxu0 %v368
    %619 = vmatpush1.msra.mxu0 %v367
    %620 = vmatprep.subr.mxu0 %v372
    %621 = vmatpush1.msra.mxu0 %v371
    %622 = vmatprep.subr.mxu0 %v376
    %623 = vmatpush1.msra.mxu0 %v375
    %624 = vmatprep.subr.mxu0 %v380
    %625 = vmatpush1.msra.mxu0 %v379
    %626 = vmatprep.subr.mxu0 %v384
    %627 = vmatpush1.msra.mxu0 %v383
    %628 = vmatprep.subr.mxu0 %v388
    %629 = vmatpush1.msra.mxu0 %v387
    %630 = vmatprep.subr.mxu0 0.0
    %631 = vmatpush1.msra.mxu0 0.0
    %632 = vmatprep.subr.mxu0 0.0
    %633 = vmatpush1.msra.mxu0 0.0
    %634 = vmatprep.subr.mxu0 0.0
    %635 = vmatpush1.msra.mxu0 0.0
    %636 = vmatprep.subr.mxu0 0.0
    %637 = vmatpush1.msra.mxu0 0.0
    %638 = vmatprep.subr.mxu0 0.0
    %639 = vmatpush1.msra.mxu0 0.0
    %640 = vmatprep.subr.mxu0 0.0
    %641 = vmatpush1.msra.mxu0 0.0
    %642 = vmatprep.subr.mxu0 0.0
    %643 = vmatpush1.msra.mxu0 0.0
    %644 = vmatprep.subr.mxu0 0.0
    %645 = vmatpush1.msra.mxu0 0.0
    %646 = vmatprep.subr.mxu0 0.0
    %647 = vmatpush1.msra.mxu0 0.0
    %648 = vmatprep.subr.mxu0 0.0
    %649 = vmatpush1.msra.mxu0 0.0
    %650 = vmatprep.subr.mxu0 0.0
    %651 = vmatpush1.msra.mxu0 0.0
    %652 = vmatprep.subr.mxu0 0.0
    %653 = vmatpush1.msra.mxu0 0.0
    %654 = vmatprep.subr.mxu0 0.0
    %655 = vmatpush1.msra.mxu0 0.0
    %656 = vmatprep.subr.mxu0 0.0
    %657 = vmatpush1.msra.mxu0 0.0
    %658 = vmatprep.subr.mxu0 0.0
    %659 = vmatpush1.msra.mxu0 0.0
    %660 = vmatprep.subr.mxu0 0.0
    %661 = vmatpush1.msra.mxu0 0.0
    %662 = vmatprep.mubr.f32.mxu0 0.0
    %663 = vmatmul.mubr.f32.gmra.mrb[0].mxu0 %v326
    %v664 = vpop.f32.mrb[0].mxu0
    %v665 = vadd.f32 %v523, %v664
    %v666 = vpop.f32.mrb[0].mxu0
    %v667 = vadd.f32 %v525, %v666
    %668 = vdwg.mxu0
    %669 = vmatprep.subr.mxu0 %v330
    %670 = vmatpush1.msra.mxu0 %v329
    %671 = vmatprep.subr.mxu0 %v334
    %672 = vmatpush1.msra.mxu0 %v333
    %673 = vmatprep.subr.mxu0 %v338
    %674 = vmatpush1.msra.mxu0 %v337
    %675 = vmatprep.subr.mxu0 %v342
    %676 = vmatpush1.msra.mxu0 %v341
    %677 = vmatprep.subr.mxu0 %v346
    %678 = vmatpush1.msra.mxu0 %v345
    %679 = vmatprep.subr.mxu0 %v350
    %680 = vmatpush1.msra.mxu0 %v349
    %681 = vmatprep.subr.mxu0 %v354
    %682 = vmatpush1.msra.mxu0 %v353
    %683 = vmatprep.subr.mxu0 %v358
    %684 = vmatpush1.msra.mxu0 %v357
    %685 = vmatprep.subr.mxu0 %v362
    %686 = vmatpush1.msra.mxu0 %v361
    %687 = vmatprep.subr.mxu0 %v366
    %688 = vmatpush1.msra.mxu0 %v365
    %689 = vmatprep.subr.mxu0 %v370
    %690 = vmatpush1.msra.mxu0 %v369
    %691 = vmatprep.subr.mxu0 %v374
    %692 = vmatpush1.msra.mxu0 %v373
    %693 = vmatprep.subr.mxu0 %v378
    %694 = vmatpush1.msra.mxu0 %v377
    %695 = vmatprep.subr.mxu0 %v382
    %696 = vmatpush1.msra.mxu0 %v381
    %697 = vmatprep.subr.mxu0 %v386
    %698 = vmatpush1.msra.mxu0 %v385
    %699 = vmatprep.subr.mxu0 %v390
    %700 = vmatpush1.msra.mxu0 %v389
    %701 = vmatprep.subr.mxu0 0.0
    %702 = vmatpush1.msra.mxu0 0.0
    %703 = vmatprep.subr.mxu0 0.0
    %704 = vmatpush1.msra.mxu0 0.0
    %705 = vmatprep.subr.mxu0 0.0
    %706 = vmatpush1.msra.mxu0 0.0
    %707 = vmatprep.subr.mxu0 0.0
    %708 = vmatpush1.msra.mxu0 0.0
    %709 = vmatprep.subr.mxu0 0.0
    %710 = vmatpush1.msra.mxu0 0.0
    %711 = vmatprep.subr.mxu0 0.0
    %712 = vmatpush1.msra.mxu0 0.0
    %713 = vmatprep.subr.mxu0 0.0
    %714 = vmatpush1.msra.mxu0 0.0
    %715 = vmatprep.subr.mxu0 0.0
    %716 = vmatpush1.msra.mxu0 0.0
    %717 = vmatprep.subr.mxu0 0.0
    %718 = vmatpush1.msra.mxu0 0.0
    %719 = vmatprep.subr.mxu0 0.0
    %720 = vmatpush1.msra.mxu0 0.0
    %721 = vmatprep.subr.mxu0 0.0
    %722 = vmatpush1.msra.mxu0 0.0
    %723 = vmatprep.subr.mxu0 0.0
    %724 = vmatpush1.msra.mxu0 0.0
    %725 = vmatprep.subr.mxu0 0.0
    %726 = vmatpush1.msra.mxu0 0.0
    %727 = vmatprep.subr.mxu0 0.0
    %728 = vmatpush1.msra.mxu0 0.0
    %729 = vmatprep.subr.mxu0 0.0
    %730 = vmatpush1.msra.mxu0 0.0
    %731 = vmatprep.subr.mxu0 0.0
    %732 = vmatpush1.msra.mxu0 0.0
    %733 = vmatprep.mubr.f32.mxu0 0.0
    %734 = vmatmul.mubr.f32.gmra.mrb[0].mxu0 %v326
    %v735 = vpop.f32.mrb[0].mxu0
    %v736 = vadd.f32 %v594, %v735
    %v737 = vpop.f32.mrb[0].mxu0
    %v738 = vadd.f32 %v596, %v737
    %739 = vdwg.mxu0
    %v740 = vld [vmem:[%s3 + $0x3] sm:$0x1]
    %v741 = vlaneseq
    %v742 = vshrl.u32 %v741, 7
    %v743 = vsub.s32 0, %v742
    %v744 = vrot.slane %v740, %v743
    %v745 = vadd.f32 %v665, %v744
    %v746 = vxor.u32 %v745, 2147483648
    %v747 = vmul.f32 %v746, 1.442695
    %v748 = vpow.pop %v747
    %v749 = vadd.f32 %v748, 1.0
    %v750 = vrcp.pop %v749
    %v751 = vmul.f32 1.0, %v750
    %v752 = vld [vmem:[%s3 + $0x4] sm:$0x1]
    %v753 = vlaneseq
    %v754 = vshrl.u32 %v753, 7
    %v755 = vsub.s32 0, %v754
    %v756 = vrot.slane %v752, %v755
    %v757 = vadd.f32 %v667, %v756
    %v758 = vxor.u32 %v757, 2147483648
    %v759 = vmul.f32 %v758, 1.442695
    %v760 = vpow.pop %v759
    %v761 = vadd.f32 %v760, 1.0
    %v762 = vrcp.pop %v761
    %v763 = vmul.f32 1.0, %v762
    %v764 = vld [vmem:[%s3 + $0x5] sm:$0x1]
    %v765 = vlaneseq
    %v766 = vshrl.u32 %v765, 7
    %v767 = vsub.s32 0, %v766
    %v768 = vrot.slane %v764, %v767
    %v769 = vadd.f32 %v736, %v768
    %v770 = vtanh.pop %v769
    %v771 = vld [vmem:[%s3 + $0x6] sm:$0x1]
    %v772 = vlaneseq
    %v773 = vshrl.u32 %v772, 7
    %v774 = vsub.s32 0, %v773
    %v775 = vrot.slane %v771, %v774
    %v776 = vadd.f32 %v738, %v775
    %v777 = vxor.u32 %v776, 2147483648
    %v778 = vmul.f32 %v777, 1.442695
    %v779 = vpow.pop %v778
    %v780 = vadd.f32 %v779, 1.0
    %v781 = vrcp.pop %v780
    %v782 = vmul.f32 1.0, %v781
    %v783 = vmul.f32 %v763, %v47
    %v784 = vmul.f32 %v751, %v770
    %v785 = vadd.f32 %v783, %v784
    %v786 = vtanh.pop %v785
    %v787 = vmul.f32 %v782, %v786
    %s788 = scalar_lea.vmem [#allocation2], 384
    %v789 = vld [vmem:[%s788] sm:$0xff]
    %v790 = vld [vmem:[%s788 + $0x8] sm:$0xff]
    %v791 = vld [vmem:[%s788 + $0x10] sm:$0xff]
    %v792 = vld [vmem:[%s788 + $0x18] sm:$0xff]
    %v793 = vld [vmem:[%s788 + $0x20] sm:$0xff]
    %v794 = vld [vmem:[%s788 + $0x28] sm:$0xff]
    %v795 = vld [vmem:[%s788 + $0x30] sm:$0xff]
    %v796 = vld [vmem:[%s788 + $0x38] sm:$0xff]
    %v797 = vld [vmem:[%s788 + $0x40] sm:$0xff]
    %v798 = vld [vmem:[%s788 + $0x48] sm:$0xff]
    %v799 = vld [vmem:[%s788 + $0x50] sm:$0xff]
    %v800 = vld [vmem:[%s788 + $0x58] sm:$0xff]
    %v801 = vld [vmem:[%s788 + $0x60] sm:$0xff]
    %v802 = vld [vmem:[%s788 + $0x68] sm:$0xff]
    %v803 = vld [vmem:[%s788 + $0x70] sm:$0xff]
    %v804 = vld [vmem:[%s788 + $0x78] sm:$0xff]
    %v805 = vld [vmem:[%s3 + $0x7] sm:$0x1]
    %v806 = vlaneseq
    %v807 = vshrl.u32 %v806, 7
    %v808 = vsub.s32 0, %v807
    %v809 = vrot.slane %v805, %v808
    %810 = vmatprep.subr.mxu0 0.0
    %811 = vmatpush1.msra.mxu0 %v789
    %812 = vmatprep.subr.mxu0 0.0
    %813 = vmatpush1.msra.mxu0 %v790
    %814 = vmatprep.subr.mxu0 0.0
    %815 = vmatpush1.msra.mxu0 %v791
    %816 = vmatprep.subr.mxu0 0.0
    %817 = vmatpush1.msra.mxu0 %v792
    %818 = vmatprep.subr.mxu0 0.0
    %819 = vmatpush1.msra.mxu0 %v793
    %820 = vmatprep.subr.mxu0 0.0
    %821 = vmatpush1.msra.mxu0 %v794
    %822 = vmatprep.subr.mxu0 0.0
    %823 = vmatpush1.msra.mxu0 %v795
    %824 = vmatprep.subr.mxu0 0.0
    %825 = vmatpush1.msra.mxu0 %v796
    %826 = vmatprep.subr.mxu0 0.0
    %827 = vmatpush1.msra.mxu0 %v797
    %828 = vmatprep.subr.mxu0 0.0
    %829 = vmatpush1.msra.mxu0 %v798
    %830 = vmatprep.subr.mxu0 0.0
    %831 = vmatpush1.msra.mxu0 %v799
    %832 = vmatprep.subr.mxu0 0.0
    %833 = vmatpush1.msra.mxu0 %v800
    %834 = vmatprep.subr.mxu0 0.0
    %835 = vmatpush1.msra.mxu0 %v801
    %836 = vmatprep.subr.mxu0 0.0
    %837 = vmatpush1.msra.mxu0 %v802
    %838 = vmatprep.subr.mxu0 0.0
    %839 = vmatpush1.msra.mxu0 %v803
    %840 = vmatprep.subr.mxu0 0.0
    %841 = vmatpush1.msra.mxu0 %v804
    %842 = vmatprep.subr.mxu0 0.0
    %843 = vmatpush1.msra.mxu0 0.0
    %844 = vmatprep.subr.mxu0 0.0
    %845 = vmatpush1.msra.mxu0 0.0
    %846 = vmatprep.subr.mxu0 0.0
    %847 = vmatpush1.msra.mxu0 0.0
    %848 = vmatprep.subr.mxu0 0.0
    %849 = vmatpush1.msra.mxu0 0.0
    %850 = vmatprep.subr.mxu0 0.0
    %851 = vmatpush1.msra.mxu0 0.0
    %852 = vmatprep.subr.mxu0 0.0
    %853 = vmatpush1.msra.mxu0 0.0
    %854 = vmatprep.subr.mxu0 0.0
    %855 = vmatpush1.msra.mxu0 0.0
    %856 = vmatprep.subr.mxu0 0.0
    %857 = vmatpush1.msra.mxu0 0.0
    %858 = vmatprep.subr.mxu0 0.0
    %859 = vmatpush1.msra.mxu0 0.0
    %860 = vmatprep.subr.mxu0 0.0
    %861 = vmatpush1.msra.mxu0 0.0
    %862 = vmatprep.subr.mxu0 0.0
    %863 = vmatpush1.msra.mxu0 0.0
    %864 = vmatprep.subr.mxu0 0.0
    %865 = vmatpush1.msra.mxu0 0.0
    %866 = vmatprep.subr.mxu0 0.0
    %867 = vmatpush1.msra.mxu0 0.0
    %868 = vmatprep.subr.mxu0 0.0
    %869 = vmatpush1.msra.mxu0 0.0
    %870 = vmatprep.subr.mxu0 0.0
    %871 = vmatpush1.msra.mxu0 0.0
    %872 = vmatprep.subr.mxu0 0.0
    %873 = vmatpush1.msra.mxu0 0.0
    %874 = vmatprep.mubr.f32.mxu0 0.0
    %875 = vmatmul.mubr.f32.gmra.mrb[0].mxu0 %v787
    %v876 = vpop.f32.mrb[0].mxu0
    %v877 = vadd.f32 %v809, %v876
    %v878 = vpop.f32.mrb[0].mxu0
    %879 = vdwg.mxu0
    %v880 = vmax.f32 %v877, 0.0
    %s881 = scalar_lea.vmem [#allocation2], 512
    %v882 = vld [vmem:[%s881] sm:$0xff]
    %v883 = vld [vmem:[%s881 + $0x8] sm:$0xff]
    %v884 = vld [vmem:[%s881 + $0x10] sm:$0xff]
    %v885 = vld [vmem:[%s881 + $0x18] sm:$0xff]
    %v886 = vld [vmem:[%s881 + $0x20] sm:$0xff]
    %v887 = vld [vmem:[%s881 + $0x28] sm:$0xff]
    %v888 = vld [vmem:[%s881 + $0x30] sm:$0xff]
    %v889 = vld [vmem:[%s881 + $0x38] sm:$0xff]
    %v890 = vld [vmem:[%s881 + $0x40] sm:$0xff]
    %v891 = vld [vmem:[%s881 + $0x48] sm:$0xff]
    %v892 = vld [vmem:[%s881 + $0x50] sm:$0xff]
    %v893 = vld [vmem:[%s881 + $0x58] sm:$0xff]
    %v894 = vld [vmem:[%s881 + $0x60] sm:$0xff]
    %v895 = vld [vmem:[%s881 + $0x68] sm:$0xff]
    %v896 = vld [vmem:[%s881 + $0x70] sm:$0xff]
    %v897 = vld [vmem:[%s881 + $0x78] sm:$0xff]
    %v898 = vld [vmem:[%s3 + $0x8] sm:$0x1]
    %v899 = vlaneseq
    %v900 = vshrl.u32 %v899, 7
    %v901 = vsub.s32 0, %v900
    %v902 = vrot.slane %v898, %v901
    %903 = vmatprep.subr.mxu0 0.0
    %904 = vmatpush1.msra.mxu0 %v882
    %905 = vmatprep.subr.mxu0 0.0
    %906 = vmatpush1.msra.mxu0 %v883
    %907 = vmatprep.subr.mxu0 0.0
    %908 = vmatpush1.msra.mxu0 %v884
    %909 = vmatprep.subr.mxu0 0.0
    %910 = vmatpush1.msra.mxu0 %v885
    %911 = vmatprep.subr.mxu0 0.0
    %912 = vmatpush1.msra.mxu0 %v886
    %913 = vmatprep.subr.mxu0 0.0
    %914 = vmatpush1.msra.mxu0 %v887
    %915 = vmatprep.subr.mxu0 0.0
    %916 = vmatpush1.msra.mxu0 %v888
    %917 = vmatprep.subr.mxu0 0.0
    %918 = vmatpush1.msra.mxu0 %v889
    %919 = vmatprep.subr.mxu0 0.0
    %920 = vmatpush1.msra.mxu0 %v890
    %921 = vmatprep.subr.mxu0 0.0
    %922 = vmatpush1.msra.mxu0 %v891
    %923 = vmatprep.subr.mxu0 0.0
    %924 = vmatpush1.msra.mxu0 %v892
    %925 = vmatprep.subr.mxu0 0.0
    %926 = vmatpush1.msra.mxu0 %v893
    %927 = vmatprep.subr.mxu0 0.0
    %928 = vmatpush1.msra.mxu0 %v894
    %929 = vmatprep.subr.mxu0 0.0
    %930 = vmatpush1.msra.mxu0 %v895
    %931 = vmatprep.subr.mxu0 0.0
    %932 = vmatpush1.msra.mxu0 %v896
    %933 = vmatprep.subr.mxu0 0.0
    %934 = vmatpush1.msra.mxu0 %v897
    %935 = vmatprep.subr.mxu0 0.0
    %936 = vmatpush1.msra.mxu0 0.0
    %937 = vmatprep.subr.mxu0 0.0
    %938 = vmatpush1.msra.mxu0 0.0
    %939 = vmatprep.subr.mxu0 0.0
    %940 = vmatpush1.msra.mxu0 0.0
    %941 = vmatprep.subr.mxu0 0.0
    %942 = vmatpush1.msra.mxu0 0.0
    %943 = vmatprep.subr.mxu0 0.0
    %944 = vmatpush1.msra.mxu0 0.0
    %945 = vmatprep.subr.mxu0 0.0
    %946 = vmatpush1.msra.mxu0 0.0
    %947 = vmatprep.subr.mxu0 0.0
    %948 = vmatpush1.msra.mxu0 0.0
    %949 = vmatprep.subr.mxu0 0.0
    %950 = vmatpush1.msra.mxu0 0.0
    %951 = vmatprep.subr.mxu0 0.0
    %952 = vmatpush1.msra.mxu0 0.0
    %953 = vmatprep.subr.mxu0 0.0
    %954 = vmatpush1.msra.mxu0 0.0
    %955 = vmatprep.subr.mxu0 0.0
    %956 = vmatpush1.msra.mxu0 0.0
    %957 = vmatprep.subr.mxu0 0.0
    %958 = vmatpush1.msra.mxu0 0.0
    %959 = vmatprep.subr.mxu0 0.0
    %960 = vmatpush1.msra.mxu0 0.0
    %961 = vmatprep.subr.mxu0 0.0
    %962 = vmatpush1.msra.mxu0 0.0
    %963 = vmatprep.subr.mxu0 0.0
    %964 = vmatpush1.msra.mxu0 0.0
    %965 = vmatprep.subr.mxu0 0.0
    %966 = vmatpush1.msra.mxu0 0.0
    %967 = vmatprep.mubr.f32.mxu0 0.0
    %968 = vmatmul.mubr.f32.gmra.mrb[0].mxu0 %v880
    %v969 = vpop.f32.mrb[0].mxu0
    %v970 = vadd.f32 %v902, %v969
    %v971 = vpop.f32.mrb[0].mxu0
    %972 = vdwg.mxu0
    %v973 = vmax.f32 %v970, 0.0
    %s974 = scalar_lea.vmem [#allocation2], 640
    %v975 = vld [vmem:[%s974] sm:$0xff]
    %v976 = vld [vmem:[%s974 + $0x8] sm:$0xff]
    %v977 = vld [vmem:[%s974 + $0x10] sm:$0xff]
    %v978 = vld [vmem:[%s974 + $0x18] sm:$0xff]
    %v979 = vld [vmem:[%s974 + $0x20] sm:$0xff]
    %v980 = vld [vmem:[%s974 + $0x28] sm:$0xff]
    %v981 = vld [vmem:[%s974 + $0x30] sm:$0xff]
    %v982 = vld [vmem:[%s974 + $0x38] sm:$0xff]
    %v983 = vld [vmem:[%s974 + $0x40] sm:$0xff]
    %v984 = vld [vmem:[%s974 + $0x48] sm:$0xff]
    %v985 = vld [vmem:[%s974 + $0x50] sm:$0xff]
    %v986 = vld [vmem:[%s974 + $0x58] sm:$0xff]
    %v987 = vld [vmem:[%s974 + $0x60] sm:$0xff]
    %v988 = vld [vmem:[%s974 + $0x68] sm:$0xff]
    %v989 = vld [vmem:[%s974 + $0x70] sm:$0xff]
    %v990 = vld [vmem:[%s974 + $0x78] sm:$0xff]
    %v991 = vld [vmem:[%s3 + $0x9] sm:$0x1]
    %v992 = vlaneseq
    %v993 = vshrl.u32 %v992, 7
    %v994 = vsub.s32 0, %v993
    %v995 = vrot.slane %v991, %v994
    %996 = vmatprep.subr.mxu0 0.0
    %997 = vmatpush1.msra.mxu0 %v975
    %998 = vmatprep.subr.mxu0 0.0
    %999 = vmatpush1.msra.mxu0 %v976
    %1000 = vmatprep.subr.mxu0 0.0
    %1001 = vmatpush1.msra.mxu0 %v977
    %1002 = vmatprep.subr.mxu0 0.0
    %1003 = vmatpush1.msra.mxu0 %v978
    %1004 = vmatprep.subr.mxu0 0.0
    %1005 = vmatpush1.msra.mxu0 %v979
    %1006 = vmatprep.subr.mxu0 0.0
    %1007 = vmatpush1.msra.mxu0 %v980
    %1008 = vmatprep.subr.mxu0 0.0
    %1009 = vmatpush1.msra.mxu0 %v981
    %1010 = vmatprep.subr.mxu0 0.0
    %1011 = vmatpush1.msra.mxu0 %v982
    %1012 = vmatprep.subr.mxu0 0.0
    %1013 = vmatpush1.msra.mxu0 %v983
    %1014 = vmatprep.subr.mxu0 0.0
    %1015 = vmatpush1.msra.mxu0 %v984
    %1016 = vmatprep.subr.mxu0 0.0
    %1017 = vmatpush1.msra.mxu0 %v985
    %1018 = vmatprep.subr.mxu0 0.0
    %1019 = vmatpush1.msra.mxu0 %v986
    %1020 = vmatprep.subr.mxu0 0.0
    %1021 = vmatpush1.msra.mxu0 %v987
    %1022 = vmatprep.subr.mxu0 0.0
    %1023 = vmatpush1.msra.mxu0 %v988
    %1024 = vmatprep.subr.mxu0 0.0
    %1025 = vmatpush1.msra.mxu0 %v989
    %1026 = vmatprep.subr.mxu0 0.0
    %1027 = vmatpush1.msra.mxu0 %v990
    %1028 = vmatprep.subr.mxu0 0.0
    %1029 = vmatpush1.msra.mxu0 0.0
    %1030 = vmatprep.subr.mxu0 0.0
    %1031 = vmatpush1.msra.mxu0 0.0
    %1032 = vmatprep.subr.mxu0 0.0
    %1033 = vmatpush1.msra.mxu0 0.0
    %1034 = vmatprep.subr.mxu0 0.0
    %1035 = vmatpush1.msra.mxu0 0.0
    %1036 = vmatprep.subr.mxu0 0.0
    %1037 = vmatpush1.msra.mxu0 0.0
    %1038 = vmatprep.subr.mxu0 0.0
    %1039 = vmatpush1.msra.mxu0 0.0
    %1040 = vmatprep.subr.mxu0 0.0
    %1041 = vmatpush1.msra.mxu0 0.0
    %1042 = vmatprep.subr.mxu0 0.0
    %1043 = vmatpush1.msra.mxu0 0.0
    %1044 = vmatprep.subr.mxu0 0.0
    %1045 = vmatpush1.msra.mxu0 0.0
    %1046 = vmatprep.subr.mxu0 0.0
    %1047 = vmatpush1.msra.mxu0 0.0
    %1048 = vmatprep.subr.mxu0 0.0
    %1049 = vmatpush1.msra.mxu0 0.0
    %1050 = vmatprep.subr.mxu0 0.0
    %1051 = vmatpush1.msra.mxu0 0.0
    %1052 = vmatprep.subr.mxu0 0.0
    %1053 = vmatpush1.msra.mxu0 0.0
    %1054 = vmatprep.subr.mxu0 0.0
    %1055 = vmatpush1.msra.mxu0 0.0
    %1056 = vmatprep.subr.mxu0 0.0
    %1057 = vmatpush1.msra.mxu0 0.0
    %1058 = vmatprep.subr.mxu0 0.0
    %1059 = vmatpush1.msra.mxu0 0.0
    %1060 = vmatprep.mubr.f32.mxu0 0.0
    %1061 = vmatmul.mubr.f32.gmra.mrb[0].mxu0 %v973
    %v1062 = vpop.f32.mrb[0].mxu0
    %v1063 = vadd.f32 %v995, %v1062
    %v1064 = vpop.f32.mrb[0].mxu0
    %1065 = vdwg.mxu0
    %v1066 = vmax.f32 %v1063, 0.0
    %s1067 = scalar_lea.vmem [#allocation2], 768
    %v1068 = vld [vmem:[%s1067] sm:$0xff]
    %v1069 = vld [vmem:[%s1067 + $0x8] sm:$0xff]
    %v1070 = vld [vmem:[%s1067 + $0x10] sm:$0xff]
    %v1071 = vld [vmem:[%s1067 + $0x18] sm:$0xff]
    %v1072 = vld [vmem:[%s1067 + $0x20] sm:$0xff]
    %v1073 = vld [vmem:[%s1067 + $0x28] sm:$0xff]
    %v1074 = vld [vmem:[%s1067 + $0x30] sm:$0xff]
    %v1075 = vld [vmem:[%s1067 + $0x38] sm:$0xff]
    %v1076 = vld [vmem:[%s1067 + $0x40] sm:$0xff]
    %v1077 = vld [vmem:[%s1067 + $0x48] sm:$0xff]
    %v1078 = vld [vmem:[%s1067 + $0x50] sm:$0xff]
    %v1079 = vld [vmem:[%s1067 + $0x58] sm:$0xff]
    %v1080 = vld [vmem:[%s1067 + $0x60] sm:$0xff]
    %v1081 = vld [vmem:[%s1067 + $0x68] sm:$0xff]
    %v1082 = vld [vmem:[%s1067 + $0x70] sm:$0xff]
    %v1083 = vld [vmem:[%s1067 + $0x78] sm:$0xff]
    %v1084 = vld [vmem:[%s3 + $0xa] sm:$0x1]
    %v1085 = vlaneseq
    %v1086 = vshrl.u32 %v1085, 7
    %v1087 = vsub.s32 0, %v1086
    %v1088 = vrot.slane %v1084, %v1087
    %1089 = vmatprep.subr.mxu0 0.0
    %1090 = vmatpush1.msra.mxu0 %v1068
    %1091 = vmatprep.subr.mxu0 0.0
    %1092 = vmatpush1.msra.mxu0 %v1069
    %1093 = vmatprep.subr.mxu0 0.0
    %1094 = vmatpush1.msra.mxu0 %v1070
    %1095 = vmatprep.subr.mxu0 0.0
    %1096 = vmatpush1.msra.mxu0 %v1071
    %1097 = vmatprep.subr.mxu0 0.0
    %1098 = vmatpush1.msra.mxu0 %v1072
    %1099 = vmatprep.subr.mxu0 0.0
    %1100 = vmatpush1.msra.mxu0 %v1073
    %1101 = vmatprep.subr.mxu0 0.0
    %1102 = vmatpush1.msra.mxu0 %v1074
    %1103 = vmatprep.subr.mxu0 0.0
    %1104 = vmatpush1.msra.mxu0 %v1075
    %1105 = vmatprep.subr.mxu0 0.0
    %1106 = vmatpush1.msra.mxu0 %v1076
    %1107 = vmatprep.subr.mxu0 0.0
    %1108 = vmatpush1.msra.mxu0 %v1077
    %1109 = vmatprep.subr.mxu0 0.0
    %1110 = vmatpush1.msra.mxu0 %v1078
    %1111 = vmatprep.subr.mxu0 0.0
    %1112 = vmatpush1.msra.mxu0 %v1079
    %1113 = vmatprep.subr.mxu0 0.0
    %1114 = vmatpush1.msra.mxu0 %v1080
    %1115 = vmatprep.subr.mxu0 0.0
    %1116 = vmatpush1.msra.mxu0 %v1081
    %1117 = vmatprep.subr.mxu0 0.0
    %1118 = vmatpush1.msra.mxu0 %v1082
    %1119 = vmatprep.subr.mxu0 0.0
    %1120 = vmatpush1.msra.mxu0 %v1083
    %1121 = vmatprep.subr.mxu0 0.0
    %1122 = vmatpush1.msra.mxu0 0.0
    %1123 = vmatprep.subr.mxu0 0.0
    %1124 = vmatpush1.msra.mxu0 0.0
    %1125 = vmatprep.subr.mxu0 0.0
    %1126 = vmatpush1.msra.mxu0 0.0
    %1127 = vmatprep.subr.mxu0 0.0
    %1128 = vmatpush1.msra.mxu0 0.0
    %1129 = vmatprep.subr.mxu0 0.0
    %1130 = vmatpush1.msra.mxu0 0.0
    %1131 = vmatprep.subr.mxu0 0.0
    %1132 = vmatpush1.msra.mxu0 0.0
    %1133 = vmatprep.subr.mxu0 0.0
    %1134 = vmatpush1.msra.mxu0 0.0
    %1135 = vmatprep.subr.mxu0 0.0
    %1136 = vmatpush1.msra.mxu0 0.0
    %1137 = vmatprep.subr.mxu0 0.0
    %1138 = vmatpush1.msra.mxu0 0.0
    %1139 = vmatprep.subr.mxu0 0.0
    %1140 = vmatpush1.msra.mxu0 0.0
    %1141 = vmatprep.subr.mxu0 0.0
    %1142 = vmatpush1.msra.mxu0 0.0
    %1143 = vmatprep.subr.mxu0 0.0
    %1144 = vmatpush1.msra.mxu0 0.0
    %1145 = vmatprep.subr.mxu0 0.0
    %1146 = vmatpush1.msra.mxu0 0.0
    %1147 = vmatprep.subr.mxu0 0.0
    %1148 = vmatpush1.msra.mxu0 0.0
    %1149 = vmatprep.subr.mxu0 0.0
    %1150 = vmatpush1.msra.mxu0 0.0
    %1151 = vmatprep.subr.mxu0 0.0
    %1152 = vmatpush1.msra.mxu0 0.0
    %1153 = vmatprep.mubr.f32.mxu0 0.0
    %1154 = vmatmul.mubr.f32.gmra.mrb[0].mxu0 %v1066
    %v1155 = vpop.f32.mrb[0].mxu0
    %v1156 = vadd.f32 %v1088, %v1155
    %v1157 = vpop.f32.mrb[0].mxu0
    %1158 = vdwg.mxu0
    %v1159 = vlaneseq
    %v1160 = vand.u32 %v1159, 127
    %vm1161 = vcmp.lt.s32.totalorder %v1160, 4
    %v1162 = vsel %vm1161, %v1156, -1e+30
    %1163 = vmax.xlane.f32.xlu0 %v1162
    %v1164 = vpop.xlane.xlu0 %1163
    %v1165 = vsub.f32 %v1162, %v1164
    %v1166 = vmul.f32 %v1165, 1.442695
    %v1167 = vpow.pop %v1166
    %1168 = vadd.xlane.f32.xlu0 %v1167
    %v1169 = vpop.xlane.xlu0 %1168
    %v1170 = vrcp.pop %v1169
    %v1171 = vmul.f32 %v1167, %v1170
    %1172 = vrot.lane.b32.xlu0 %v1171, 1
    %v1173 = vpop.permute.xlu0 %1172
    %v1174 = vadd.f32 %v1171, %v1173
    %1175 = vrot.lane.b32.xlu0 %v1171, 2
    %v1176 = vpop.permute.xlu0 %1175
    %v1177 = vadd.f32 %v1174, %v1176
    %1178 = vrot.lane.b32.xlu0 %v1171, 3
    %v1179 = vpop.permute.xlu0 %1178
    %v1180 = vadd.f32 %v1177, %v1179
    %v1181 = vsel %vm1161, %v1180, 2.0
    %vm1182 = vcmp.lt.f32.partialorder %v1181, %v48
    %v1183 = vsel %vm1182, 1, 0
    %v1184 = vcvt.s32.f32 %v1183
    %1185 = vadd.xlane.f32.xlu0 %v1184
    %v1186 = vpop.xlane.xlu0 %1185
    %v1187 = vmin.f32 %v1186, 3.0
    %s1188 = scalar_lea.vmem [#allocation2], 896
    %v1189 = vld [vmem:[%s1188] sm:$0xff]
    %v1190 = vld [vmem:[%s1188 + $0x8] sm:$0xff]
    %v1191 = vld [vmem:[%s1188 + $0x10] sm:$0xff]
    %v1192 = vld [vmem:[%s1188 + $0x18] sm:$0xff]
    %v1193 = vld [vmem:[%s1188 + $0x20] sm:$0xff]
    %v1194 = vld [vmem:[%s1188 + $0x28] sm:$0xff]
    %v1195 = vld [vmem:[%s1188 + $0x30] sm:$0xff]
    %v1196 = vld [vmem:[%s1188 + $0x38] sm:$0xff]
    %v1197 = vld [vmem:[%s1188 + $0x40] sm:$0xff]
    %v1198 = vld [vmem:[%s1188 + $0x48] sm:$0xff]
    %v1199 = vld [vmem:[%s1188 + $0x50] sm:$0xff]
    %v1200 = vld [vmem:[%s1188 + $0x58] sm:$0xff]
    %v1201 = vld [vmem:[%s1188 + $0x60] sm:$0xff]
    %v1202 = vld [vmem:[%s1188 + $0x68] sm:$0xff]
    %v1203 = vld [vmem:[%s1188 + $0x70] sm:$0xff]
    %v1204 = vld [vmem:[%s1188 + $0x78] sm:$0xff]
    %v1205 = vld [vmem:[%s3 + $0xf] sm:$0x1]
    %v1206 = vlaneseq
    %v1207 = vshrl.u32 %v1206, 7
    %v1208 = vsub.s32 0, %v1207
    %v1209 = vrot.slane %v1205, %v1208
    %v1210 = vmul.f32 %v1187, %v1209
    %1211 = vmatprep.subr.mxu0 0.0
    %1212 = vmatpush1.msra.mxu0 %v1189
    %1213 = vmatprep.subr.mxu0 0.0
    %1214 = vmatpush1.msra.mxu0 %v1190
    %1215 = vmatprep.subr.mxu0 0.0
    %1216 = vmatpush1.msra.mxu0 %v1191
    %1217 = vmatprep.subr.mxu0 0.0
    %1218 = vmatpush1.msra.mxu0 %v1192
    %1219 = vmatprep.subr.mxu0 0.0
    %1220 = vmatpush1.msra.mxu0 %v1193
    %1221 = vmatprep.subr.mxu0 0.0
    %1222 = vmatpush1.msra.mxu0 %v1194
    %1223 = vmatprep.subr.mxu0 0.0
    %1224 = vmatpush1.msra.mxu0 %v1195
    %1225 = vmatprep.subr.mxu0 0.0
    %1226 = vmatpush1.msra.mxu0 %v1196
    %1227 = vmatprep.subr.mxu0 0.0
    %1228 = vmatpush1.msra.mxu0 %v1197
    %1229 = vmatprep.subr.mxu0 0.0
    %1230 = vmatpush1.msra.mxu0 %v1198
    %1231 = vmatprep.subr.mxu0 0.0
    %1232 = vmatpush1.msra.mxu0 %v1199
    %1233 = vmatprep.subr.mxu0 0.0
    %1234 = vmatpush1.msra.mxu0 %v1200
    %1235 = vmatprep.subr.mxu0 0.0
    %1236 = vmatpush1.msra.mxu0 %v1201
    %1237 = vmatprep.subr.mxu0 0.0
    %1238 = vmatpush1.msra.mxu0 %v1202
    %1239 = vmatprep.subr.mxu0 0.0
    %1240 = vmatpush1.msra.mxu0 %v1203
    %1241 = vmatprep.subr.mxu0 0.0
    %1242 = vmatpush1.msra.mxu0 %v1204
    %1243 = vmatprep.subr.mxu0 0.0
    %1244 = vmatpush1.msra.mxu0 0.0
    %1245 = vmatprep.subr.mxu0 0.0
    %1246 = vmatpush1.msra.mxu0 0.0
    %1247 = vmatprep.subr.mxu0 0.0
    %1248 = vmatpush1.msra.mxu0 0.0
    %1249 = vmatprep.subr.mxu0 0.0
    %1250 = vmatpush1.msra.mxu0 0.0
    %1251 = vmatprep.subr.mxu0 0.0
    %1252 = vmatpush1.msra.mxu0 0.0
    %1253 = vmatprep.subr.mxu0 0.0
    %1254 = vmatpush1.msra.mxu0 0.0
    %1255 = vmatprep.subr.mxu0 0.0
    %1256 = vmatpush1.msra.mxu0 0.0
    %1257 = vmatprep.subr.mxu0 0.0
    %1258 = vmatpush1.msra.mxu0 0.0
    %1259 = vmatprep.subr.mxu0 0.0
    %1260 = vmatpush1.msra.mxu0 0.0
    %1261 = vmatprep.subr.mxu0 0.0
    %1262 = vmatpush1.msra.mxu0 0.0
    %1263 = vmatprep.subr.mxu0 0.0
    %1264 = vmatpush1.msra.mxu0 0.0
    %1265 = vmatprep.subr.mxu0 0.0
    %1266 = vmatpush1.msra.mxu0 0.0
    %1267 = vmatprep.subr.mxu0 0.0
    %1268 = vmatpush1.msra.mxu0 0.0
    %1269 = vmatprep.subr.mxu0 0.0
    %1270 = vmatpush1.msra.mxu0 0.0
    %1271 = vmatprep.subr.mxu0 0.0
    %1272 = vmatpush1.msra.mxu0 0.0
    %1273 = vmatprep.subr.mxu0 0.0
    %1274 = vmatpush1.msra.mxu0 0.0
    %1275 = vmatprep.mubr.f32.mxu0 0.0
    %1276 = vmatmul.mubr.f32.gmra.mrb[0].mxu0 %v787
    %v1277 = vpop.f32.mrb[0].mxu0
    %v1278 = vadd.f32 %v1210, %v1277
    %v1279 = vpop.f32.mrb[0].mxu0
    %1280 = vdwg.mxu0
    %v1281 = vld [vmem:[%s3 + $0xb] sm:$0x1]
    %v1282 = vlaneseq
    %v1283 = vshrl.u32 %v1282, 7
    %v1284 = vsub.s32 0, %v1283
    %v1285 = vrot.slane %v1281, %v1284
    %v1286 = vadd.f32 %v1278, %v1285
    %v1287 = vmax.f32 %v1286, 0.0
    %s1288 = scalar_lea.vmem [#allocation2], 1024
    %v1289 = vld [vmem:[%s1288] sm:$0xff]
    %v1290 = vld [vmem:[%s1288 + $0x8] sm:$0xff]
    %v1291 = vld [vmem:[%s1288 + $0x10] sm:$0xff]
    %v1292 = vld [vmem:[%s1288 + $0x18] sm:$0xff]
    %v1293 = vld [vmem:[%s1288 + $0x20] sm:$0xff]
    %v1294 = vld [vmem:[%s1288 + $0x28] sm:$0xff]
    %v1295 = vld [vmem:[%s1288 + $0x30] sm:$0xff]
    %v1296 = vld [vmem:[%s1288 + $0x38] sm:$0xff]
    %v1297 = vld [vmem:[%s1288 + $0x40] sm:$0xff]
    %v1298 = vld [vmem:[%s1288 + $0x48] sm:$0xff]
    %v1299 = vld [vmem:[%s1288 + $0x50] sm:$0xff]
    %v1300 = vld [vmem:[%s1288 + $0x58] sm:$0xff]
    %v1301 = vld [vmem:[%s1288 + $0x60] sm:$0xff]
    %v1302 = vld [vmem:[%s1288 + $0x68] sm:$0xff]
    %v1303 = vld [vmem:[%s1288 + $0x70] sm:$0xff]
    %v1304 = vld [vmem:[%s1288 + $0x78] sm:$0xff]
    %v1305 = vld [vmem:[%s3 + $0xc] sm:$0x1]
    %v1306 = vlaneseq
    %v1307 = vshrl.u32 %v1306, 7
    %v1308 = vsub.s32 0, %v1307
    %v1309 = vrot.slane %v1305, %v1308
    %1310 = vmatprep.subr.mxu0 0.0
    %1311 = vmatpush1.msra.mxu0 %v1289
    %1312 = vmatprep.subr.mxu0 0.0
    %1313 = vmatpush1.msra.mxu0 %v1290
    %1314 = vmatprep.subr.mxu0 0.0
    %1315 = vmatpush1.msra.mxu0 %v1291
    %1316 = vmatprep.subr.mxu0 0.0
    %1317 = vmatpush1.msra.mxu0 %v1292
    %1318 = vmatprep.subr.mxu0 0.0
    %1319 = vmatpush1.msra.mxu0 %v1293
    %1320 = vmatprep.subr.mxu0 0.0
    %1321 = vmatpush1.msra.mxu0 %v1294
    %1322 = vmatprep.subr.mxu0 0.0
    %1323 = vmatpush1.msra.mxu0 %v1295
    %1324 = vmatprep.subr.mxu0 0.0
    %1325 = vmatpush1.msra.mxu0 %v1296
    %1326 = vmatprep.subr.mxu0 0.0
    %1327 = vmatpush1.msra.mxu0 %v1297
    %1328 = vmatprep.subr.mxu0 0.0
    %1329 = vmatpush1.msra.mxu0 %v1298
    %1330 = vmatprep.subr.mxu0 0.0
    %1331 = vmatpush1.msra.mxu0 %v1299
    %1332 = vmatprep.subr.mxu0 0.0
    %1333 = vmatpush1.msra.mxu0 %v1300
    %1334 = vmatprep.subr.mxu0 0.0
    %1335 = vmatpush1.msra.mxu0 %v1301
    %1336 = vmatprep.subr.mxu0 0.0
    %1337 = vmatpush1.msra.mxu0 %v1302
    %1338 = vmatprep.subr.mxu0 0.0
    %1339 = vmatpush1.msra.mxu0 %v1303
    %1340 = vmatprep.subr.mxu0 0.0
    %1341 = vmatpush1.msra.mxu0 %v1304
    %1342 = vmatprep.subr.mxu0 0.0
    %1343 = vmatpush1.msra.mxu0 0.0
    %1344 = vmatprep.subr.mxu0 0.0
    %1345 = vmatpush1.msra.mxu0 0.0
    %1346 = vmatprep.subr.mxu0 0.0
    %1347 = vmatpush1.msra.mxu0 0.0
    %1348 = vmatprep.subr.mxu0 0.0
    %1349 = vmatpush1.msra.mxu0 0.0
    %1350 = vmatprep.subr.mxu0 0.0
    %1351 = vmatpush1.msra.mxu0 0.0
    %1352 = vmatprep.subr.mxu0 0.0
    %1353 = vmatpush1.msra.mxu0 0.0
    %1354 = vmatprep.subr.mxu0 0.0
    %1355 = vmatpush1.msra.mxu0 0.0
    %1356 = vmatprep.subr.mxu0 0.0
    %1357 = vmatpush1.msra.mxu0 0.0
    %1358 = vmatprep.subr.mxu0 0.0
    %1359 = vmatpush1.msra.mxu0 0.0
    %1360 = vmatprep.subr.mxu0 0.0
    %1361 = vmatpush1.msra.mxu0 0.0
    %1362 = vmatprep.subr.mxu0 0.0
    %1363 = vmatpush1.msra.mxu0 0.0
    %1364 = vmatprep.subr.mxu0 0.0
    %1365 = vmatpush1.msra.mxu0 0.0
    %1366 = vmatprep.subr.mxu0 0.0
    %1367 = vmatpush1.msra.mxu0 0.0
    %1368 = vmatprep.subr.mxu0 0.0
    %1369 = vmatpush1.msra.mxu0 0.0
    %1370 = vmatprep.subr.mxu0 0.0
    %1371 = vmatpush1.msra.mxu0 0.0
    %1372 = vmatprep.subr.mxu0 0.0
    %1373 = vmatpush1.msra.mxu0 0.0
    %1374 = vmatprep.mubr.f32.mxu0 0.0
    %1375 = vmatmul.mubr.f32.gmra.mrb[0].mxu0 %v1287
    %v1376 = vpop.f32.mrb[0].mxu0
    %v1377 = vadd.f32 %v1309, %v1376
    %v1378 = vpop.f32.mrb[0].mxu0
    %1379 = vdwg.mxu0
    %v1380 = vmax.f32 %v1377, 0.0
    %s1381 = scalar_lea.vmem [#allocation2], 1152
    %v1382 = vld [vmem:[%s1381] sm:$0xff]
    %v1383 = vld [vmem:[%s1381 + $0x8] sm:$0xff]
    %v1384 = vld [vmem:[%s1381 + $0x10] sm:$0xff]
    %v1385 = vld [vmem:[%s1381 + $0x18] sm:$0xff]
    %v1386 = vld [vmem:[%s1381 + $0x20] sm:$0xff]
    %v1387 = vld [vmem:[%s1381 + $0x28] sm:$0xff]
    %v1388 = vld [vmem:[%s1381 + $0x30] sm:$0xff]
    %v1389 = vld [vmem:[%s1381 + $0x38] sm:$0xff]
    %v1390 = vld [vmem:[%s1381 + $0x40] sm:$0xff]
    %v1391 = vld [vmem:[%s1381 + $0x48] sm:$0xff]
    %v1392 = vld [vmem:[%s1381 + $0x50] sm:$0xff]
    %v1393 = vld [vmem:[%s1381 + $0x58] sm:$0xff]
    %v1394 = vld [vmem:[%s1381 + $0x60] sm:$0xff]
    %v1395 = vld [vmem:[%s1381 + $0x68] sm:$0xff]
    %v1396 = vld [vmem:[%s1381 + $0x70] sm:$0xff]
    %v1397 = vld [vmem:[%s1381 + $0x78] sm:$0xff]
    %v1398 = vld [vmem:[%s3 + $0xd] sm:$0x1]
    %v1399 = vlaneseq
    %v1400 = vshrl.u32 %v1399, 7
    %v1401 = vsub.s32 0, %v1400
    %v1402 = vrot.slane %v1398, %v1401
    %1403 = vmatprep.subr.mxu0 0.0
    %1404 = vmatpush1.msra.mxu0 %v1382
    %1405 = vmatprep.subr.mxu0 0.0
    %1406 = vmatpush1.msra.mxu0 %v1383
    %1407 = vmatprep.subr.mxu0 0.0
    %1408 = vmatpush1.msra.mxu0 %v1384
    %1409 = vmatprep.subr.mxu0 0.0
    %1410 = vmatpush1.msra.mxu0 %v1385
    %1411 = vmatprep.subr.mxu0 0.0
    %1412 = vmatpush1.msra.mxu0 %v1386
    %1413 = vmatprep.subr.mxu0 0.0
    %1414 = vmatpush1.msra.mxu0 %v1387
    %1415 = vmatprep.subr.mxu0 0.0
    %1416 = vmatpush1.msra.mxu0 %v1388
    %1417 = vmatprep.subr.mxu0 0.0
    %1418 = vmatpush1.msra.mxu0 %v1389
    %1419 = vmatprep.subr.mxu0 0.0
    %1420 = vmatpush1.msra.mxu0 %v1390
    %1421 = vmatprep.subr.mxu0 0.0
    %1422 = vmatpush1.msra.mxu0 %v1391
    %1423 = vmatprep.subr.mxu0 0.0
    %1424 = vmatpush1.msra.mxu0 %v1392
    %1425 = vmatprep.subr.mxu0 0.0
    %1426 = vmatpush1.msra.mxu0 %v1393
    %1427 = vmatprep.subr.mxu0 0.0
    %1428 = vmatpush1.msra.mxu0 %v1394
    %1429 = vmatprep.subr.mxu0 0.0
    %1430 = vmatpush1.msra.mxu0 %v1395
    %1431 = vmatprep.subr.mxu0 0.0
    %1432 = vmatpush1.msra.mxu0 %v1396
    %1433 = vmatprep.subr.mxu0 0.0
    %1434 = vmatpush1.msra.mxu0 %v1397
    %1435 = vmatprep.subr.mxu0 0.0
    %1436 = vmatpush1.msra.mxu0 0.0
    %1437 = vmatprep.subr.mxu0 0.0
    %1438 = vmatpush1.msra.mxu0 0.0
    %1439 = vmatprep.subr.mxu0 0.0
    %1440 = vmatpush1.msra.mxu0 0.0
    %1441 = vmatprep.subr.mxu0 0.0
    %1442 = vmatpush1.msra.mxu0 0.0
    %1443 = vmatprep.subr.mxu0 0.0
    %1444 = vmatpush1.msra.mxu0 0.0
    %1445 = vmatprep.subr.mxu0 0.0
    %1446 = vmatpush1.msra.mxu0 0.0
    %1447 = vmatprep.subr.mxu0 0.0
    %1448 = vmatpush1.msra.mxu0 0.0
    %1449 = vmatprep.subr.mxu0 0.0
    %1450 = vmatpush1.msra.mxu0 0.0
    %1451 = vmatprep.subr.mxu0 0.0
    %1452 = vmatpush1.msra.mxu0 0.0
    %1453 = vmatprep.subr.mxu0 0.0
    %1454 = vmatpush1.msra.mxu0 0.0
    %1455 = vmatprep.subr.mxu0 0.0
    %1456 = vmatpush1.msra.mxu0 0.0
    %1457 = vmatprep.subr.mxu0 0.0
    %1458 = vmatpush1.msra.mxu0 0.0
    %1459 = vmatprep.subr.mxu0 0.0
    %1460 = vmatpush1.msra.mxu0 0.0
    %1461 = vmatprep.subr.mxu0 0.0
    %1462 = vmatpush1.msra.mxu0 0.0
    %1463 = vmatprep.subr.mxu0 0.0
    %1464 = vmatpush1.msra.mxu0 0.0
    %1465 = vmatprep.subr.mxu0 0.0
    %1466 = vmatpush1.msra.mxu0 0.0
    %1467 = vmatprep.mubr.f32.mxu0 0.0
    %1468 = vmatmul.mubr.f32.gmra.mrb[0].mxu0 %v1380
    %v1469 = vpop.f32.mrb[0].mxu0
    %v1470 = vadd.f32 %v1402, %v1469
    %v1471 = vpop.f32.mrb[0].mxu0
    %1472 = vdwg.mxu0
    %v1473 = vmax.f32 %v1470, 0.0
    %s1474 = scalar_lea.vmem [#allocation2], 1280
    %v1475 = vld [vmem:[%s1474] sm:$0xff]
    %v1476 = vld [vmem:[%s1474 + $0x8] sm:$0xff]
    %v1477 = vld [vmem:[%s1474 + $0x10] sm:$0xff]
    %v1478 = vld [vmem:[%s1474 + $0x18] sm:$0xff]
    %v1479 = vld [vmem:[%s1474 + $0x20] sm:$0xff]
    %v1480 = vld [vmem:[%s1474 + $0x28] sm:$0xff]
    %v1481 = vld [vmem:[%s1474 + $0x30] sm:$0xff]
    %v1482 = vld [vmem:[%s1474 + $0x38] sm:$0xff]
    %v1483 = vld [vmem:[%s1474 + $0x40] sm:$0xff]
    %v1484 = vld [vmem:[%s1474 + $0x48] sm:$0xff]
    %v1485 = vld [vmem:[%s1474 + $0x50] sm:$0xff]
    %v1486 = vld [vmem:[%s1474 + $0x58] sm:$0xff]
    %v1487 = vld [vmem:[%s1474 + $0x60] sm:$0xff]
    %v1488 = vld [vmem:[%s1474 + $0x68] sm:$0xff]
    %v1489 = vld [vmem:[%s1474 + $0x70] sm:$0xff]
    %v1490 = vld [vmem:[%s1474 + $0x78] sm:$0xff]
    %v1491 = vld [vmem:[%s3 + $0xe] sm:$0x1]
    %v1492 = vlaneseq
    %v1493 = vshrl.u32 %v1492, 7
    %v1494 = vsub.s32 0, %v1493
    %v1495 = vrot.slane %v1491, %v1494
    %1496 = vmatprep.subr.mxu0 0.0
    %1497 = vmatpush1.msra.mxu0 %v1475
    %1498 = vmatprep.subr.mxu0 0.0
    %1499 = vmatpush1.msra.mxu0 %v1476
    %1500 = vmatprep.subr.mxu0 0.0
    %1501 = vmatpush1.msra.mxu0 %v1477
    %1502 = vmatprep.subr.mxu0 0.0
    %1503 = vmatpush1.msra.mxu0 %v1478
    %1504 = vmatprep.subr.mxu0 0.0
    %1505 = vmatpush1.msra.mxu0 %v1479
    %1506 = vmatprep.subr.mxu0 0.0
    %1507 = vmatpush1.msra.mxu0 %v1480
    %1508 = vmatprep.subr.mxu0 0.0
    %1509 = vmatpush1.msra.mxu0 %v1481
    %1510 = vmatprep.subr.mxu0 0.0
    %1511 = vmatpush1.msra.mxu0 %v1482
    %1512 = vmatprep.subr.mxu0 0.0
    %1513 = vmatpush1.msra.mxu0 %v1483
    %1514 = vmatprep.subr.mxu0 0.0
    %1515 = vmatpush1.msra.mxu0 %v1484
    %1516 = vmatprep.subr.mxu0 0.0
    %1517 = vmatpush1.msra.mxu0 %v1485
    %1518 = vmatprep.subr.mxu0 0.0
    %1519 = vmatpush1.msra.mxu0 %v1486
    %1520 = vmatprep.subr.mxu0 0.0
    %1521 = vmatpush1.msra.mxu0 %v1487
    %1522 = vmatprep.subr.mxu0 0.0
    %1523 = vmatpush1.msra.mxu0 %v1488
    %1524 = vmatprep.subr.mxu0 0.0
    %1525 = vmatpush1.msra.mxu0 %v1489
    %1526 = vmatprep.subr.mxu0 0.0
    %1527 = vmatpush1.msra.mxu0 %v1490
    %1528 = vmatprep.subr.mxu0 0.0
    %1529 = vmatpush1.msra.mxu0 0.0
    %1530 = vmatprep.subr.mxu0 0.0
    %1531 = vmatpush1.msra.mxu0 0.0
    %1532 = vmatprep.subr.mxu0 0.0
    %1533 = vmatpush1.msra.mxu0 0.0
    %1534 = vmatprep.subr.mxu0 0.0
    %1535 = vmatpush1.msra.mxu0 0.0
    %1536 = vmatprep.subr.mxu0 0.0
    %1537 = vmatpush1.msra.mxu0 0.0
    %1538 = vmatprep.subr.mxu0 0.0
    %1539 = vmatpush1.msra.mxu0 0.0
    %1540 = vmatprep.subr.mxu0 0.0
    %1541 = vmatpush1.msra.mxu0 0.0
    %1542 = vmatprep.subr.mxu0 0.0
    %1543 = vmatpush1.msra.mxu0 0.0
    %1544 = vmatprep.subr.mxu0 0.0
    %1545 = vmatpush1.msra.mxu0 0.0
    %1546 = vmatprep.subr.mxu0 0.0
    %1547 = vmatpush1.msra.mxu0 0.0
    %1548 = vmatprep.subr.mxu0 0.0
    %1549 = vmatpush1.msra.mxu0 0.0
    %1550 = vmatprep.subr.mxu0 0.0
    %1551 = vmatpush1.msra.mxu0 0.0
    %1552 = vmatprep.subr.mxu0 0.0
    %1553 = vmatpush1.msra.mxu0 0.0
    %1554 = vmatprep.subr.mxu0 0.0
    %1555 = vmatpush1.msra.mxu0 0.0
    %1556 = vmatprep.subr.mxu0 0.0
    %1557 = vmatpush1.msra.mxu0 0.0
    %1558 = vmatprep.subr.mxu0 0.0
    %1559 = vmatpush1.msra.mxu0 0.0
    %1560 = vmatprep.mubr.f32.mxu0 0.0
    %1561 = vmatmul.mubr.f32.gmra.mrb[0].mxu0 %v1473
    %v1562 = vpop.f32.mrb[0].mxu0
    %v1563 = vadd.f32 %v1495, %v1562
    %v1564 = vpop.f32.mrb[0].mxu0
    %1565 = vdwg.mxu0
    %v1566 = vxor.u32 %v1563, 2147483648
    %v1567 = vmul.f32 %v1566, 1.442695
    %v1568 = vpow.pop %v1567
    %v1569 = vadd.f32 %v1568, 1.0
    %v1570 = vrcp.pop %v1569
    %v1571 = vmul.f32 1.0, %v1570
    %vm1572 = vcmp.eq.s32.totalorder %v1160, 4
    %v1573 = vsel %vm1572, %v1571, 0.0
    %v1574 = vsel %vm1161, %v1171, %v1573
    %1575 = vst [vmem:[%s4] sm:$0xff] %v1574
    // Predicated region
    $region26: #{actor_forward.1} parent=1 // pred_check
      _
    $region27: #{actor_forward.1} parent=1 // pred_check_branch
      %1577 = sbr.rel (0) target = $region29
    $region28: #{actor_forward.1} parent=1 // pred_region
      _
    $region29: #{actor_forward.1} parent=1 // pred_fallthru
      _
    // Predicated region
    $region30: #{actor_forward.1} parent=1 // pred_check
      _
    $region31: #{actor_forward.1} parent=1 // pred_check_branch
      %1579 = sbr.rel (0) target = $region33
    $region32: #{actor_forward.1} parent=1 // pred_region
      _
    $region33: #{actor_forward.1} parent=1 // pred_fallthru
      _
    %1580 = vsyncpa [#allocation3], 1
    %1581 = vsyncpa [#allocation5], 1

</llo_original>
